<compile_context>
chip_gen: v7x
topology: tpu7x:2x2x1
jax: 0.10.0
libtpu: 0.0.40
codegen_flags: <defaults>
</compile_context>

<pallas_src>
import math
import functools

import jax
import jax.numpy as jnp
from jax.experimental import pallas as pl
from jax.experimental.pallas import tpu as pltpu


def _round_up(x, m):
    return ((x + m - 1) // m) * m


def _dnn_kernel(x_ref, w0_ref, wr_ref, b_ref, o_ref, *, num_layers, k_int):
    # x_ref : [TB, d_in_pad]     f32
    # w0_ref: [d_in_pad, D]      bf16   (layer 0, laid out (in, out))
    # wr_ref: [L-1, k_int, D]    bf16   (layers 1..L-1, contraction dim shrunk)
    # b_ref : [L, D]             f32
    # o_ref : [TB, D]            f32
    h = jnp.dot(x_ref[...].astype(jnp.bfloat16), w0_ref[...],
                preferred_element_type=jnp.float32)
    h = h + b_ref[pl.ds(0, 1), :]
    if num_layers > 1:
        h = jnp.maximum(h, 0.0)
    for i in range(1, num_layers):            # static unroll (L = 25)
        # Padded columns of h (>= true layer width) are exactly zero, so
        # contracting only the first k_int columns is exact.
        lhs = h[:, :k_int].astype(jnp.bfloat16)
        h = jnp.dot(lhs, wr_ref[i - 1], preferred_element_type=jnp.float32)
        h = h + b_ref[pl.ds(i, 1), :]
        if i < num_layers - 1:                # ReLU on all but the last layer
            h = jnp.maximum(h, 0.0)
    o_ref[...] = h.astype(o_ref.dtype)


def dnn_layer_nums(input_dim, output_dim):
    base = 2 ** math.floor(math.log2(input_dim)) // 32
    lower_bound = 128 // 32
    if base < lower_bound:
        base = lower_bound
    return ([input_dim] + [base, base * 2] + [base * 4 for _ in range(20)]
            + [base * 2, base] + [output_dim])


def build_params(input_dim, output_dim, key):
    """PyTorch-style Linear init, packed into split padded bf16 stacks.

    Returns (w0[bf16], wr[bf16], bv[f32], layer_nums, d_in_pad, D, K_int)."""
    layer_nums = dnn_layer_nums(input_dim, output_dim)
    L = len(layer_nums) - 1
    d_in_pad = max(8, _round_up(input_dim, 8))              # sublane-aligned only
    D = max(128, _round_up(max(layer_nums[1:]), 128))       # lane width (=128 here)
    # Contraction width for layers 1..L-1 (their input widths), padded to 32.
    K_int = max(32, _round_up(max(layer_nums[1:L]), 32)) if L > 1 else 32
    K_int = min(K_int, D)

    w0 = jnp.zeros((d_in_pad, D), jnp.float32)
    wr = jnp.zeros((max(L - 1, 1), K_int, D), jnp.float32)
    bv = jnp.zeros((L, D), jnp.float32)
    for i in range(L):
        fan_in, fan_out = layer_nums[i], layer_nums[i + 1]
        key, kw, kb = jax.random.split(key, 3)
        bound = 1.0 / math.sqrt(fan_in)
        w = jax.random.uniform(kw, (fan_in, fan_out), jnp.float32, -bound, bound)
        b = jax.random.uniform(kb, (fan_out,), jnp.float32, -bound, bound)
        if i == 0:
            w0 = w0.at[:fan_in, :fan_out].set(w)
        else:
            wr = wr.at[i - 1, :fan_in, :fan_out].set(w)
        bv = bv.at[i, :fan_out].set(b)
    return (w0.astype(jnp.bfloat16), wr.astype(jnp.bfloat16), bv,
            layer_nums, d_in_pad, D, K_int)


def dnn_forward(x, w0, wr, bv, layer_nums, d_in_pad, D, K_int):
    B, input_dim = x.shape
    L = len(layer_nums) - 1
    output_dim = layer_nums[-1]

    # Batch tiling:
    #  * B <= 128: one grid step (per-step overhead dominates tiny work).
    #  * 128 < B <= 1024: exactly 2 "parallel" tiles (both v7x TensorCores).
    #  * B > 1024: 512-row tiles (amortize grid-step overhead, fill MXU M dim).
    if B <= 128:
        tb = max(8, _round_up(B, 8))
    elif B <= 1024:
        tb = _round_up(-(-B // 2), 8)
    else:
        tb = 512
    b_pad = _round_up(B, tb)
    n_tiles = b_pad // tb

    x_f32 = x.astype(jnp.float32)
    if b_pad != B or d_in_pad != input_dim:
        # Only pad batch rows (and features to the next multiple of 8) - no
        # 128-wide feature padding materialized in the wrapper anymore.
        x_in = jnp.zeros((b_pad, d_in_pad), jnp.float32).at[:B, :input_dim].set(x_f32)
    else:
        x_in = x_f32

    weight_bytes = (w0.size * w0.dtype.itemsize + wr.size * wr.dtype.itemsize
                    + bv.size * bv.dtype.itemsize)
    io_bytes = (tb * d_in_pad + tb * D) * 4
    vmem_limit = min(int(2 * (weight_bytes + io_bytes)) + (8 << 20), 100 << 20)

    out_pad = pl.pallas_call(
        functools.partial(_dnn_kernel, num_layers=L, k_int=K_int),
        out_shape=jax.ShapeDtypeStruct((b_pad, D), jnp.float32),
        grid=(n_tiles,),
        in_specs=[
            pl.BlockSpec((tb, d_in_pad), lambda i: (i, 0)),
            pl.BlockSpec((d_in_pad, D), lambda i: (0, 0)),
            pl.BlockSpec((wr.shape[0], K_int, D), lambda i: (0, 0, 0)),
            pl.BlockSpec((L, D), lambda i: (0, 0)),
        ],
        out_specs=pl.BlockSpec((tb, D), lambda i: (i, 0)),
        compiler_params=pltpu.CompilerParams(
            dimension_semantics=("parallel",),
            vmem_limit_bytes=vmem_limit),
    )(x_in, w0, wr, bv)

    return out_pad[:B, :output_dim]


def dnn_reference_matched(x, w0, wr, bv, layer_nums):
    """Reference mirroring the kernel numerics: bf16 dot operands, f32 accum."""
    L = len(layer_nums) - 1
    h = x.astype(jnp.float32)
    for i in range(L):
        fi, fo = layer_nums[i], layer_nums[i + 1]
        w = (w0[:fi, :fo] if i == 0 else wr[i - 1, :fi, :fo])
        lhs = h[:, :fi].astype(jnp.bfloat16).astype(jnp.float32)
        rhs = w.astype(jnp.float32)
        h = jnp.dot(lhs, rhs, precision=jax.lax.Precision.HIGHEST) + bv[i, :fo]
        if i < L - 1:
            h = jnp.maximum(h, 0.0)
    return h


def dnn_reference_f32(x, w0, wr, bv, layer_nums):
    """Module-semantics reference: bf16-stored weights, full f32 activations."""
    L = len(layer_nums) - 1
    h = x.astype(jnp.float32)
    for i in range(L):
        fi, fo = layer_nums[i], layer_nums[i + 1]
        w = (w0[:fi, :fo] if i == 0 else wr[i - 1, :fi, :fo]).astype(jnp.float32)
        h = jnp.dot(h, w, precision=jax.lax.Precision.HIGHEST) + bv[i, :fo]
        if i < L - 1:
            h = jnp.maximum(h, 0.0)
    return h


if __name__ == "__main__":
    input_dim = 32
    output_dim = 2
    batch = 8

    key = jax.random.PRNGKey(0)
    kx, kp = jax.random.split(key)

    (w0, wr, bv, layer_nums, d_in_pad, D, K_int) = build_params(
        input_dim, output_dim, kp)
    x = jax.random.normal(kx, (batch, input_dim), jnp.float32)

    out = dnn_forward(x, w0, wr, bv, layer_nums, d_in_pad, D, K_int)
    out = jax.block_until_ready(out)
    assert out.shape == (batch, output_dim), out.shape

    # Tight check against a reference that mirrors the kernel's bf16-operand /
    # f32-accumulate numerics (only reduction-order differences remain).
    ref_m = dnn_reference_matched(x, w0, wr, bv, layer_nums)
    assert jnp.allclose(out, ref_m, atol=2e-3, rtol=2e-3), (out, ref_m)

    # Looser sanity check against the f32-activation module semantics
    # (bf16 weight storage + bf16 dot LHS are the only approximations).
    ref_f = dnn_reference_f32(x, w0, wr, bv, layer_nums)
    assert jnp.allclose(out, ref_f, atol=5e-2, rtol=5e-2), (out, ref_f)

    print("KERNEL_OK")
</pallas_src>

<mosaic_0001>
module attributes {stable_mosaic.version = 11 : i64} {
  func.func @_dnn_kernel(%arg0: i32, %arg1: memref<8x32xf32, #tpu.memory_space<vmem>>, %arg2: memref<32x128xbf16, #tpu.memory_space<vmem>>, %arg3: memref<24x32x128xbf16, #tpu.memory_space<vmem>>, %arg4: memref<25x128xf32, #tpu.memory_space<vmem>>, %arg5: memref<8x128xf32, #tpu.memory_space<vmem>>) attributes {dimension_semantics = [#tpu.dimension_semantics<parallel>], iteration_bounds = array<i64: 1>, scalar_prefetch = 0 : i64, scratch_operands = 0 : i64, tpu.core_type = #tpu.core_type<tc>, window_params = [{transform_indices = @transform_0, window_bounds = array<i64: 8, 32>}, {pipeline_mode = #tpu.pipeline_mode<synchronous>, transform_indices = @transform_1, window_bounds = array<i64: 32, 128>}, {pipeline_mode = #tpu.pipeline_mode<synchronous>, transform_indices = @transform_2, window_bounds = array<i64: 24, 32, 128>}, {pipeline_mode = #tpu.pipeline_mode<synchronous>, transform_indices = @transform_3, window_bounds = array<i64: 25, 128>}, {transform_indices = @transform_4, window_bounds = array<i64: 8, 128>}]} {
    %c0 = arith.constant 0 : index
    %c0_0 = arith.constant 0 : index
    %0 = vector.load %arg1[%c0, %c0_0] : memref<8x32xf32, #tpu.memory_space<vmem>>, vector<8x32xf32>
    %1 = arith.truncf %0 : vector<8x32xf32> to vector<8x32xbf16>
    %c0_1 = arith.constant 0 : index
    %c0_2 = arith.constant 0 : index
    %2 = vector.load %arg2[%c0_1, %c0_2] : memref<32x128xbf16, #tpu.memory_space<vmem>>, vector<32x128xbf16>
    %cst = arith.constant dense<0.000000e+00> : vector<8x128xf32>
    %3 = tpu.matmul %1, %2, %cst {dimension_numbers = #tpu.dot_dimension_numbers<[1], [0], [0], [1], [0, 0, 1, 1], [], []>} : vector<8x32xbf16>, vector<32x128xbf16>, vector<8x128xf32> -> vector<8x128xf32>
    %c0_3 = arith.constant 0 : index
    %c0_4 = arith.constant 0 : index
    %4 = vector.load %arg4[%c0_3, %c0_4] : memref<25x128xf32, #tpu.memory_space<vmem>>, vector<1x128xf32>
    %5 = vector.broadcast %4 : vector<1x128xf32> to vector<8x128xf32>
    %6 = arith.addf %3, %5 : vector<8x128xf32>
    %cst_5 = arith.constant 0.000000e+00 : f32
    %7 = vector.broadcast %cst_5 : f32 to vector<8x128xf32>
    %8 = arith.maximumf %6, %7 : vector<8x128xf32>
    %9 = vector.extract_strided_slice %8 {offsets = [0, 0], sizes = [8, 32], strides = [1, 1]} : vector<8x128xf32> to vector<8x32xf32>
    %10 = arith.truncf %9 : vector<8x32xf32> to vector<8x32xbf16>
    %c0_6 = arith.constant 0 : index
    %c0_7 = arith.constant 0 : index
    %c0_8 = arith.constant 0 : index
    %11 = vector.load %arg3[%c0_6, %c0_7, %c0_8] : memref<24x32x128xbf16, #tpu.memory_space<vmem>>, vector<1x32x128xbf16>
    %12 = vector.shape_cast %11 : vector<1x32x128xbf16> to vector<32x128xbf16>
    %cst_9 = arith.constant dense<0.000000e+00> : vector<8x128xf32>
    %13 = tpu.matmul %10, %12, %cst_9 {dimension_numbers = #tpu.dot_dimension_numbers<[1], [0], [0], [1], [0, 0, 1, 1], [], []>} : vector<8x32xbf16>, vector<32x128xbf16>, vector<8x128xf32> -> vector<8x128xf32>
    %c1 = arith.constant 1 : index
    %c0_10 = arith.constant 0 : index
    %14 = vector.load %arg4[%c1, %c0_10] : memref<25x128xf32, #tpu.memory_space<vmem>>, vector<1x128xf32>
    %15 = vector.broadcast %14 : vector<1x128xf32> to vector<8x128xf32>
    %16 = arith.addf %13, %15 : vector<8x128xf32>
    %cst_11 = arith.constant 0.000000e+00 : f32
    %17 = vector.broadcast %cst_11 : f32 to vector<8x128xf32>
    %18 = arith.maximumf %16, %17 : vector<8x128xf32>
    %19 = vector.extract_strided_slice %18 {offsets = [0, 0], sizes = [8, 32], strides = [1, 1]} : vector<8x128xf32> to vector<8x32xf32>
    %20 = arith.truncf %19 : vector<8x32xf32> to vector<8x32xbf16>
    %c1_12 = arith.constant 1 : index
    %c0_13 = arith.constant 0 : index
    %c0_14 = arith.constant 0 : index
    %21 = vector.load %arg3[%c1_12, %c0_13, %c0_14] : memref<24x32x128xbf16, #tpu.memory_space<vmem>>, vector<1x32x128xbf16>
    %22 = vector.shape_cast %21 : vector<1x32x128xbf16> to vector<32x128xbf16>
    %cst_15 = arith.constant dense<0.000000e+00> : vector<8x128xf32>
    %23 = tpu.matmul %20, %22, %cst_15 {dimension_numbers = #tpu.dot_dimension_numbers<[1], [0], [0], [1], [0, 0, 1, 1], [], []>} : vector<8x32xbf16>, vector<32x128xbf16>, vector<8x128xf32> -> vector<8x128xf32>
    %c2 = arith.constant 2 : index
    %c0_16 = arith.constant 0 : index
    %24 = vector.load %arg4[%c2, %c0_16] : memref<25x128xf32, #tpu.memory_space<vmem>>, vector<1x128xf32>
    %25 = vector.broadcast %24 : vector<1x128xf32> to vector<8x128xf32>
    %26 = arith.addf %23, %25 : vector<8x128xf32>
    %cst_17 = arith.constant 0.000000e+00 : f32
    %27 = vector.broadcast %cst_17 : f32 to vector<8x128xf32>
    %28 = arith.maximumf %26, %27 : vector<8x128xf32>
    %29 = vector.extract_strided_slice %28 {offsets = [0, 0], sizes = [8, 32], strides = [1, 1]} : vector<8x128xf32> to vector<8x32xf32>
    %30 = arith.truncf %29 : vector<8x32xf32> to vector<8x32xbf16>
    %c2_18 = arith.constant 2 : index
    %c0_19 = arith.constant 0 : index
    %c0_20 = arith.constant 0 : index
    %31 = vector.load %arg3[%c2_18, %c0_19, %c0_20] : memref<24x32x128xbf16, #tpu.memory_space<vmem>>, vector<1x32x128xbf16>
    %32 = vector.shape_cast %31 : vector<1x32x128xbf16> to vector<32x128xbf16>
    %cst_21 = arith.constant dense<0.000000e+00> : vector<8x128xf32>
    %33 = tpu.matmul %30, %32, %cst_21 {dimension_numbers = #tpu.dot_dimension_numbers<[1], [0], [0], [1], [0, 0, 1, 1], [], []>} : vector<8x32xbf16>, vector<32x128xbf16>, vector<8x128xf32> -> vector<8x128xf32>
    %c3 = arith.constant 3 : index
    %c0_22 = arith.constant 0 : index
    %34 = vector.load %arg4[%c3, %c0_22] : memref<25x128xf32, #tpu.memory_space<vmem>>, vector<1x128xf32>
    %35 = vector.broadcast %34 : vector<1x128xf32> to vector<8x128xf32>
    %36 = arith.addf %33, %35 : vector<8x128xf32>
    %cst_23 = arith.constant 0.000000e+00 : f32
    %37 = vector.broadcast %cst_23 : f32 to vector<8x128xf32>
    %38 = arith.maximumf %36, %37 : vector<8x128xf32>
    %39 = vector.extract_strided_slice %38 {offsets = [0, 0], sizes = [8, 32], strides = [1, 1]} : vector<8x128xf32> to vector<8x32xf32>
    %40 = arith.truncf %39 : vector<8x32xf32> to vector<8x32xbf16>
    %c3_24 = arith.constant 3 : index
    %c0_25 = arith.constant 0 : index
    %c0_26 = arith.constant 0 : index
    %41 = vector.load %arg3[%c3_24, %c0_25, %c0_26] : memref<24x32x128xbf16, #tpu.memory_space<vmem>>, vector<1x32x128xbf16>
    %42 = vector.shape_cast %41 : vector<1x32x128xbf16> to vector<32x128xbf16>
    %cst_27 = arith.constant dense<0.000000e+00> : vector<8x128xf32>
    %43 = tpu.matmul %40, %42, %cst_27 {dimension_numbers = #tpu.dot_dimension_numbers<[1], [0], [0], [1], [0, 0, 1, 1], [], []>} : vector<8x32xbf16>, vector<32x128xbf16>, vector<8x128xf32> -> vector<8x128xf32>
    %c4 = arith.constant 4 : index
    %c0_28 = arith.constant 0 : index
    %44 = vector.load %arg4[%c4, %c0_28] : memref<25x128xf32, #tpu.memory_space<vmem>>, vector<1x128xf32>
    %45 = vector.broadcast %44 : vector<1x128xf32> to vector<8x128xf32>
    %46 = arith.addf %43, %45 : vector<8x128xf32>
    %cst_29 = arith.constant 0.000000e+00 : f32
    %47 = vector.broadcast %cst_29 : f32 to vector<8x128xf32>
    %48 = arith.maximumf %46, %47 : vector<8x128xf32>
    %49 = vector.extract_strided_slice %48 {offsets = [0, 0], sizes = [8, 32], strides = [1, 1]} : vector<8x128xf32> to vector<8x32xf32>
    %50 = arith.truncf %49 : vector<8x32xf32> to vector<8x32xbf16>
    %c4_30 = arith.constant 4 : index
    %c0_31 = arith.constant 0 : index
    %c0_32 = arith.constant 0 : index
    %51 = vector.load %arg3[%c4_30, %c0_31, %c0_32] : memref<24x32x128xbf16, #tpu.memory_space<vmem>>, vector<1x32x128xbf16>
    %52 = vector.shape_cast %51 : vector<1x32x128xbf16> to vector<32x128xbf16>
    %cst_33 = arith.constant dense<0.000000e+00> : vector<8x128xf32>
    %53 = tpu.matmul %50, %52, %cst_33 {dimension_numbers = #tpu.dot_dimension_numbers<[1], [0], [0], [1], [0, 0, 1, 1], [], []>} : vector<8x32xbf16>, vector<32x128xbf16>, vector<8x128xf32> -> vector<8x128xf32>
    %c5 = arith.constant 5 : index
    %c0_34 = arith.constant 0 : index
    %54 = vector.load %arg4[%c5, %c0_34] : memref<25x128xf32, #tpu.memory_space<vmem>>, vector<1x128xf32>
    %55 = vector.broadcast %54 : vector<1x128xf32> to vector<8x128xf32>
    %56 = arith.addf %53, %55 : vector<8x128xf32>
    %cst_35 = arith.constant 0.000000e+00 : f32
    %57 = vector.broadcast %cst_35 : f32 to vector<8x128xf32>
    %58 = arith.maximumf %56, %57 : vector<8x128xf32>
    %59 = vector.extract_strided_slice %58 {offsets = [0, 0], sizes = [8, 32], strides = [1, 1]} : vector<8x128xf32> to vector<8x32xf32>
    %60 = arith.truncf %59 : vector<8x32xf32> to vector<8x32xbf16>
    %c5_36 = arith.constant 5 : index
    %c0_37 = arith.constant 0 : index
    %c0_38 = arith.constant 0 : index
    %61 = vector.load %arg3[%c5_36, %c0_37, %c0_38] : memref<24x32x128xbf16, #tpu.memory_space<vmem>>, vector<1x32x128xbf16>
    %62 = vector.shape_cast %61 : vector<1x32x128xbf16> to vector<32x128xbf16>
    %cst_39 = arith.constant dense<0.000000e+00> : vector<8x128xf32>
    %63 = tpu.matmul %60, %62, %cst_39 {dimension_numbers = #tpu.dot_dimension_numbers<[1], [0], [0], [1], [0, 0, 1, 1], [], []>} : vector<8x32xbf16>, vector<32x128xbf16>, vector<8x128xf32> -> vector<8x128xf32>
    %c6 = arith.constant 6 : index
    %c0_40 = arith.constant 0 : index
    %64 = vector.load %arg4[%c6, %c0_40] : memref<25x128xf32, #tpu.memory_space<vmem>>, vector<1x128xf32>
    %65 = vector.broadcast %64 : vector<1x128xf32> to vector<8x128xf32>
    %66 = arith.addf %63, %65 : vector<8x128xf32>
    %cst_41 = arith.constant 0.000000e+00 : f32
    %67 = vector.broadcast %cst_41 : f32 to vector<8x128xf32>
    %68 = arith.maximumf %66, %67 : vector<8x128xf32>
    %69 = vector.extract_strided_slice %68 {offsets = [0, 0], sizes = [8, 32], strides = [1, 1]} : vector<8x128xf32> to vector<8x32xf32>
    %70 = arith.truncf %69 : vector<8x32xf32> to vector<8x32xbf16>
    %c6_42 = arith.constant 6 : index
    %c0_43 = arith.constant 0 : index
    %c0_44 = arith.constant 0 : index
    %71 = vector.load %arg3[%c6_42, %c0_43, %c0_44] : memref<24x32x128xbf16, #tpu.memory_space<vmem>>, vector<1x32x128xbf16>
    %72 = vector.shape_cast %71 : vector<1x32x128xbf16> to vector<32x128xbf16>
    %cst_45 = arith.constant dense<0.000000e+00> : vector<8x128xf32>
    %73 = tpu.matmul %70, %72, %cst_45 {dimension_numbers = #tpu.dot_dimension_numbers<[1], [0], [0], [1], [0, 0, 1, 1], [], []>} : vector<8x32xbf16>, vector<32x128xbf16>, vector<8x128xf32> -> vector<8x128xf32>
    %c7 = arith.constant 7 : index
    %c0_46 = arith.constant 0 : index
    %74 = vector.load %arg4[%c7, %c0_46] : memref<25x128xf32, #tpu.memory_space<vmem>>, vector<1x128xf32>
    %75 = vector.broadcast %74 : vector<1x128xf32> to vector<8x128xf32>
    %76 = arith.addf %73, %75 : vector<8x128xf32>
    %cst_47 = arith.constant 0.000000e+00 : f32
    %77 = vector.broadcast %cst_47 : f32 to vector<8x128xf32>
    %78 = arith.maximumf %76, %77 : vector<8x128xf32>
    %79 = vector.extract_strided_slice %78 {offsets = [0, 0], sizes = [8, 32], strides = [1, 1]} : vector<8x128xf32> to vector<8x32xf32>
    %80 = arith.truncf %79 : vector<8x32xf32> to vector<8x32xbf16>
    %c7_48 = arith.constant 7 : index
    %c0_49 = arith.constant 0 : index
    %c0_50 = arith.constant 0 : index
    %81 = vector.load %arg3[%c7_48, %c0_49, %c0_50] : memref<24x32x128xbf16, #tpu.memory_space<vmem>>, vector<1x32x128xbf16>
    %82 = vector.shape_cast %81 : vector<1x32x128xbf16> to vector<32x128xbf16>
    %cst_51 = arith.constant dense<0.000000e+00> : vector<8x128xf32>
    %83 = tpu.matmul %80, %82, %cst_51 {dimension_numbers = #tpu.dot_dimension_numbers<[1], [0], [0], [1], [0, 0, 1, 1], [], []>} : vector<8x32xbf16>, vector<32x128xbf16>, vector<8x128xf32> -> vector<8x128xf32>
    %c8 = arith.constant 8 : index
    %c0_52 = arith.constant 0 : index
    %84 = vector.load %arg4[%c8, %c0_52] : memref<25x128xf32, #tpu.memory_space<vmem>>, vector<1x128xf32>
    %85 = vector.broadcast %84 : vector<1x128xf32> to vector<8x128xf32>
    %86 = arith.addf %83, %85 : vector<8x128xf32>
    %cst_53 = arith.constant 0.000000e+00 : f32
    %87 = vector.broadcast %cst_53 : f32 to vector<8x128xf32>
    %88 = arith.maximumf %86, %87 : vector<8x128xf32>
    %89 = vector.extract_strided_slice %88 {offsets = [0, 0], sizes = [8, 32], strides = [1, 1]} : vector<8x128xf32> to vector<8x32xf32>
    %90 = arith.truncf %89 : vector<8x32xf32> to vector<8x32xbf16>
    %c8_54 = arith.constant 8 : index
    %c0_55 = arith.constant 0 : index
    %c0_56 = arith.constant 0 : index
    %91 = vector.load %arg3[%c8_54, %c0_55, %c0_56] : memref<24x32x128xbf16, #tpu.memory_space<vmem>>, vector<1x32x128xbf16>
    %92 = vector.shape_cast %91 : vector<1x32x128xbf16> to vector<32x128xbf16>
    %cst_57 = arith.constant dense<0.000000e+00> : vector<8x128xf32>
    %93 = tpu.matmul %90, %92, %cst_57 {dimension_numbers = #tpu.dot_dimension_numbers<[1], [0], [0], [1], [0, 0, 1, 1], [], []>} : vector<8x32xbf16>, vector<32x128xbf16>, vector<8x128xf32> -> vector<8x128xf32>
    %c9 = arith.constant 9 : index
    %c0_58 = arith.constant 0 : index
    %94 = vector.load %arg4[%c9, %c0_58] : memref<25x128xf32, #tpu.memory_space<vmem>>, vector<1x128xf32>
    %95 = vector.broadcast %94 : vector<1x128xf32> to vector<8x128xf32>
    %96 = arith.addf %93, %95 : vector<8x128xf32>
    %cst_59 = arith.constant 0.000000e+00 : f32
    %97 = vector.broadcast %cst_59 : f32 to vector<8x128xf32>
    %98 = arith.maximumf %96, %97 : vector<8x128xf32>
    %99 = vector.extract_strided_slice %98 {offsets = [0, 0], sizes = [8, 32], strides = [1, 1]} : vector<8x128xf32> to vector<8x32xf32>
    %100 = arith.truncf %99 : vector<8x32xf32> to vector<8x32xbf16>
    %c9_60 = arith.constant 9 : index
    %c0_61 = arith.constant 0 : index
    %c0_62 = arith.constant 0 : index
    %101 = vector.load %arg3[%c9_60, %c0_61, %c0_62] : memref<24x32x128xbf16, #tpu.memory_space<vmem>>, vector<1x32x128xbf16>
    %102 = vector.shape_cast %101 : vector<1x32x128xbf16> to vector<32x128xbf16>
    %cst_63 = arith.constant dense<0.000000e+00> : vector<8x128xf32>
    %103 = tpu.matmul %100, %102, %cst_63 {dimension_numbers = #tpu.dot_dimension_numbers<[1], [0], [0], [1], [0, 0, 1, 1], [], []>} : vector<8x32xbf16>, vector<32x128xbf16>, vector<8x128xf32> -> vector<8x128xf32>
    %c10 = arith.constant 10 : index
    %c0_64 = arith.constant 0 : index
    %104 = vector.load %arg4[%c10, %c0_64] : memref<25x128xf32, #tpu.memory_space<vmem>>, vector<1x128xf32>
    %105 = vector.broadcast %104 : vector<1x128xf32> to vector<8x128xf32>
    %106 = arith.addf %103, %105 : vector<8x128xf32>
    %cst_65 = arith.constant 0.000000e+00 : f32
    %107 = vector.broadcast %cst_65 : f32 to vector<8x128xf32>
    %108 = arith.maximumf %106, %107 : vector<8x128xf32>
    %109 = vector.extract_strided_slice %108 {offsets = [0, 0], sizes = [8, 32], strides = [1, 1]} : vector<8x128xf32> to vector<8x32xf32>
    %110 = arith.truncf %109 : vector<8x32xf32> to vector<8x32xbf16>
    %c10_66 = arith.constant 10 : index
    %c0_67 = arith.constant 0 : index
    %c0_68 = arith.constant 0 : index
    %111 = vector.load %arg3[%c10_66, %c0_67, %c0_68] : memref<24x32x128xbf16, #tpu.memory_space<vmem>>, vector<1x32x128xbf16>
    %112 = vector.shape_cast %111 : vector<1x32x128xbf16> to vector<32x128xbf16>
    %cst_69 = arith.constant dense<0.000000e+00> : vector<8x128xf32>
    %113 = tpu.matmul %110, %112, %cst_69 {dimension_numbers = #tpu.dot_dimension_numbers<[1], [0], [0], [1], [0, 0, 1, 1], [], []>} : vector<8x32xbf16>, vector<32x128xbf16>, vector<8x128xf32> -> vector<8x128xf32>
    %c11 = arith.constant 11 : index
    %c0_70 = arith.constant 0 : index
    %114 = vector.load %arg4[%c11, %c0_70] : memref<25x128xf32, #tpu.memory_space<vmem>>, vector<1x128xf32>
    %115 = vector.broadcast %114 : vector<1x128xf32> to vector<8x128xf32>
    %116 = arith.addf %113, %115 : vector<8x128xf32>
    %cst_71 = arith.constant 0.000000e+00 : f32
    %117 = vector.broadcast %cst_71 : f32 to vector<8x128xf32>
    %118 = arith.maximumf %116, %117 : vector<8x128xf32>
    %119 = vector.extract_strided_slice %118 {offsets = [0, 0], sizes = [8, 32], strides = [1, 1]} : vector<8x128xf32> to vector<8x32xf32>
    %120 = arith.truncf %119 : vector<8x32xf32> to vector<8x32xbf16>
    %c11_72 = arith.constant 11 : index
    %c0_73 = arith.constant 0 : index
    %c0_74 = arith.constant 0 : index
    %121 = vector.load %arg3[%c11_72, %c0_73, %c0_74] : memref<24x32x128xbf16, #tpu.memory_space<vmem>>, vector<1x32x128xbf16>
    %122 = vector.shape_cast %121 : vector<1x32x128xbf16> to vector<32x128xbf16>
    %cst_75 = arith.constant dense<0.000000e+00> : vector<8x128xf32>
    %123 = tpu.matmul %120, %122, %cst_75 {dimension_numbers = #tpu.dot_dimension_numbers<[1], [0], [0], [1], [0, 0, 1, 1], [], []>} : vector<8x32xbf16>, vector<32x128xbf16>, vector<8x128xf32> -> vector<8x128xf32>
    %c12 = arith.constant 12 : index
    %c0_76 = arith.constant 0 : index
    %124 = vector.load %arg4[%c12, %c0_76] : memref<25x128xf32, #tpu.memory_space<vmem>>, vector<1x128xf32>
    %125 = vector.broadcast %124 : vector<1x128xf32> to vector<8x128xf32>
    %126 = arith.addf %123, %125 : vector<8x128xf32>
    %cst_77 = arith.constant 0.000000e+00 : f32
    %127 = vector.broadcast %cst_77 : f32 to vector<8x128xf32>
    %128 = arith.maximumf %126, %127 : vector<8x128xf32>
    %129 = vector.extract_strided_slice %128 {offsets = [0, 0], sizes = [8, 32], strides = [1, 1]} : vector<8x128xf32> to vector<8x32xf32>
    %130 = arith.truncf %129 : vector<8x32xf32> to vector<8x32xbf16>
    %c12_78 = arith.constant 12 : index
    %c0_79 = arith.constant 0 : index
    %c0_80 = arith.constant 0 : index
    %131 = vector.load %arg3[%c12_78, %c0_79, %c0_80] : memref<24x32x128xbf16, #tpu.memory_space<vmem>>, vector<1x32x128xbf16>
    %132 = vector.shape_cast %131 : vector<1x32x128xbf16> to vector<32x128xbf16>
    %cst_81 = arith.constant dense<0.000000e+00> : vector<8x128xf32>
    %133 = tpu.matmul %130, %132, %cst_81 {dimension_numbers = #tpu.dot_dimension_numbers<[1], [0], [0], [1], [0, 0, 1, 1], [], []>} : vector<8x32xbf16>, vector<32x128xbf16>, vector<8x128xf32> -> vector<8x128xf32>
    %c13 = arith.constant 13 : index
    %c0_82 = arith.constant 0 : index
    %134 = vector.load %arg4[%c13, %c0_82] : memref<25x128xf32, #tpu.memory_space<vmem>>, vector<1x128xf32>
    %135 = vector.broadcast %134 : vector<1x128xf32> to vector<8x128xf32>
    %136 = arith.addf %133, %135 : vector<8x128xf32>
    %cst_83 = arith.constant 0.000000e+00 : f32
    %137 = vector.broadcast %cst_83 : f32 to vector<8x128xf32>
    %138 = arith.maximumf %136, %137 : vector<8x128xf32>
    %139 = vector.extract_strided_slice %138 {offsets = [0, 0], sizes = [8, 32], strides = [1, 1]} : vector<8x128xf32> to vector<8x32xf32>
    %140 = arith.truncf %139 : vector<8x32xf32> to vector<8x32xbf16>
    %c13_84 = arith.constant 13 : index
    %c0_85 = arith.constant 0 : index
    %c0_86 = arith.constant 0 : index
    %141 = vector.load %arg3[%c13_84, %c0_85, %c0_86] : memref<24x32x128xbf16, #tpu.memory_space<vmem>>, vector<1x32x128xbf16>
    %142 = vector.shape_cast %141 : vector<1x32x128xbf16> to vector<32x128xbf16>
    %cst_87 = arith.constant dense<0.000000e+00> : vector<8x128xf32>
    %143 = tpu.matmul %140, %142, %cst_87 {dimension_numbers = #tpu.dot_dimension_numbers<[1], [0], [0], [1], [0, 0, 1, 1], [], []>} : vector<8x32xbf16>, vector<32x128xbf16>, vector<8x128xf32> -> vector<8x128xf32>
    %c14 = arith.constant 14 : index
    %c0_88 = arith.constant 0 : index
    %144 = vector.load %arg4[%c14, %c0_88] : memref<25x128xf32, #tpu.memory_space<vmem>>, vector<1x128xf32>
    %145 = vector.broadcast %144 : vector<1x128xf32> to vector<8x128xf32>
    %146 = arith.addf %143, %145 : vector<8x128xf32>
    %cst_89 = arith.constant 0.000000e+00 : f32
    %147 = vector.broadcast %cst_89 : f32 to vector<8x128xf32>
    %148 = arith.maximumf %146, %147 : vector<8x128xf32>
    %149 = vector.extract_strided_slice %148 {offsets = [0, 0], sizes = [8, 32], strides = [1, 1]} : vector<8x128xf32> to vector<8x32xf32>
    %150 = arith.truncf %149 : vector<8x32xf32> to vector<8x32xbf16>
    %c14_90 = arith.constant 14 : index
    %c0_91 = arith.constant 0 : index
    %c0_92 = arith.constant 0 : index
    %151 = vector.load %arg3[%c14_90, %c0_91, %c0_92] : memref<24x32x128xbf16, #tpu.memory_space<vmem>>, vector<1x32x128xbf16>
    %152 = vector.shape_cast %151 : vector<1x32x128xbf16> to vector<32x128xbf16>
    %cst_93 = arith.constant dense<0.000000e+00> : vector<8x128xf32>
    %153 = tpu.matmul %150, %152, %cst_93 {dimension_numbers = #tpu.dot_dimension_numbers<[1], [0], [0], [1], [0, 0, 1, 1], [], []>} : vector<8x32xbf16>, vector<32x128xbf16>, vector<8x128xf32> -> vector<8x128xf32>
    %c15 = arith.constant 15 : index
    %c0_94 = arith.constant 0 : index
    %154 = vector.load %arg4[%c15, %c0_94] : memref<25x128xf32, #tpu.memory_space<vmem>>, vector<1x128xf32>
    %155 = vector.broadcast %154 : vector<1x128xf32> to vector<8x128xf32>
    %156 = arith.addf %153, %155 : vector<8x128xf32>
    %cst_95 = arith.constant 0.000000e+00 : f32
    %157 = vector.broadcast %cst_95 : f32 to vector<8x128xf32>
    %158 = arith.maximumf %156, %157 : vector<8x128xf32>
    %159 = vector.extract_strided_slice %158 {offsets = [0, 0], sizes = [8, 32], strides = [1, 1]} : vector<8x128xf32> to vector<8x32xf32>
    %160 = arith.truncf %159 : vector<8x32xf32> to vector<8x32xbf16>
    %c15_96 = arith.constant 15 : index
    %c0_97 = arith.constant 0 : index
    %c0_98 = arith.constant 0 : index
    %161 = vector.load %arg3[%c15_96, %c0_97, %c0_98] : memref<24x32x128xbf16, #tpu.memory_space<vmem>>, vector<1x32x128xbf16>
    %162 = vector.shape_cast %161 : vector<1x32x128xbf16> to vector<32x128xbf16>
    %cst_99 = arith.constant dense<0.000000e+00> : vector<8x128xf32>
    %163 = tpu.matmul %160, %162, %cst_99 {dimension_numbers = #tpu.dot_dimension_numbers<[1], [0], [0], [1], [0, 0, 1, 1], [], []>} : vector<8x32xbf16>, vector<32x128xbf16>, vector<8x128xf32> -> vector<8x128xf32>
    %c16 = arith.constant 16 : index
    %c0_100 = arith.constant 0 : index
    %164 = vector.load %arg4[%c16, %c0_100] : memref<25x128xf32, #tpu.memory_space<vmem>>, vector<1x128xf32>
    %165 = vector.broadcast %164 : vector<1x128xf32> to vector<8x128xf32>
    %166 = arith.addf %163, %165 : vector<8x128xf32>
    %cst_101 = arith.constant 0.000000e+00 : f32
    %167 = vector.broadcast %cst_101 : f32 to vector<8x128xf32>
    %168 = arith.maximumf %166, %167 : vector<8x128xf32>
    %169 = vector.extract_strided_slice %168 {offsets = [0, 0], sizes = [8, 32], strides = [1, 1]} : vector<8x128xf32> to vector<8x32xf32>
    %170 = arith.truncf %169 : vector<8x32xf32> to vector<8x32xbf16>
    %c16_102 = arith.constant 16 : index
    %c0_103 = arith.constant 0 : index
    %c0_104 = arith.constant 0 : index
    %171 = vector.load %arg3[%c16_102, %c0_103, %c0_104] : memref<24x32x128xbf16, #tpu.memory_space<vmem>>, vector<1x32x128xbf16>
    %172 = vector.shape_cast %171 : vector<1x32x128xbf16> to vector<32x128xbf16>
    %cst_105 = arith.constant dense<0.000000e+00> : vector<8x128xf32>
    %173 = tpu.matmul %170, %172, %cst_105 {dimension_numbers = #tpu.dot_dimension_numbers<[1], [0], [0], [1], [0, 0, 1, 1], [], []>} : vector<8x32xbf16>, vector<32x128xbf16>, vector<8x128xf32> -> vector<8x128xf32>
    %c17 = arith.constant 17 : index
    %c0_106 = arith.constant 0 : index
    %174 = vector.load %arg4[%c17, %c0_106] : memref<25x128xf32, #tpu.memory_space<vmem>>, vector<1x128xf32>
    %175 = vector.broadcast %174 : vector<1x128xf32> to vector<8x128xf32>
    %176 = arith.addf %173, %175 : vector<8x128xf32>
    %cst_107 = arith.constant 0.000000e+00 : f32
    %177 = vector.broadcast %cst_107 : f32 to vector<8x128xf32>
    %178 = arith.maximumf %176, %177 : vector<8x128xf32>
    %179 = vector.extract_strided_slice %178 {offsets = [0, 0], sizes = [8, 32], strides = [1, 1]} : vector<8x128xf32> to vector<8x32xf32>
    %180 = arith.truncf %179 : vector<8x32xf32> to vector<8x32xbf16>
    %c17_108 = arith.constant 17 : index
    %c0_109 = arith.constant 0 : index
    %c0_110 = arith.constant 0 : index
    %181 = vector.load %arg3[%c17_108, %c0_109, %c0_110] : memref<24x32x128xbf16, #tpu.memory_space<vmem>>, vector<1x32x128xbf16>
    %182 = vector.shape_cast %181 : vector<1x32x128xbf16> to vector<32x128xbf16>
    %cst_111 = arith.constant dense<0.000000e+00> : vector<8x128xf32>
    %183 = tpu.matmul %180, %182, %cst_111 {dimension_numbers = #tpu.dot_dimension_numbers<[1], [0], [0], [1], [0, 0, 1, 1], [], []>} : vector<8x32xbf16>, vector<32x128xbf16>, vector<8x128xf32> -> vector<8x128xf32>
    %c18 = arith.constant 18 : index
    %c0_112 = arith.constant 0 : index
    %184 = vector.load %arg4[%c18, %c0_112] : memref<25x128xf32, #tpu.memory_space<vmem>>, vector<1x128xf32>
    %185 = vector.broadcast %184 : vector<1x128xf32> to vector<8x128xf32>
    %186 = arith.addf %183, %185 : vector<8x128xf32>
    %cst_113 = arith.constant 0.000000e+00 : f32
    %187 = vector.broadcast %cst_113 : f32 to vector<8x128xf32>
    %188 = arith.maximumf %186, %187 : vector<8x128xf32>
    %189 = vector.extract_strided_slice %188 {offsets = [0, 0], sizes = [8, 32], strides = [1, 1]} : vector<8x128xf32> to vector<8x32xf32>
    %190 = arith.truncf %189 : vector<8x32xf32> to vector<8x32xbf16>
    %c18_114 = arith.constant 18 : index
    %c0_115 = arith.constant 0 : index
    %c0_116 = arith.constant 0 : index
    %191 = vector.load %arg3[%c18_114, %c0_115, %c0_116] : memref<24x32x128xbf16, #tpu.memory_space<vmem>>, vector<1x32x128xbf16>
    %192 = vector.shape_cast %191 : vector<1x32x128xbf16> to vector<32x128xbf16>
    %cst_117 = arith.constant dense<0.000000e+00> : vector<8x128xf32>
    %193 = tpu.matmul %190, %192, %cst_117 {dimension_numbers = #tpu.dot_dimension_numbers<[1], [0], [0], [1], [0, 0, 1, 1], [], []>} : vector<8x32xbf16>, vector<32x128xbf16>, vector<8x128xf32> -> vector<8x128xf32>
    %c19 = arith.constant 19 : index
    %c0_118 = arith.constant 0 : index
    %194 = vector.load %arg4[%c19, %c0_118] : memref<25x128xf32, #tpu.memory_space<vmem>>, vector<1x128xf32>
    %195 = vector.broadcast %194 : vector<1x128xf32> to vector<8x128xf32>
    %196 = arith.addf %193, %195 : vector<8x128xf32>
    %cst_119 = arith.constant 0.000000e+00 : f32
    %197 = vector.broadcast %cst_119 : f32 to vector<8x128xf32>
    %198 = arith.maximumf %196, %197 : vector<8x128xf32>
    %199 = vector.extract_strided_slice %198 {offsets = [0, 0], sizes = [8, 32], strides = [1, 1]} : vector<8x128xf32> to vector<8x32xf32>
    %200 = arith.truncf %199 : vector<8x32xf32> to vector<8x32xbf16>
    %c19_120 = arith.constant 19 : index
    %c0_121 = arith.constant 0 : index
    %c0_122 = arith.constant 0 : index
    %201 = vector.load %arg3[%c19_120, %c0_121, %c0_122] : memref<24x32x128xbf16, #tpu.memory_space<vmem>>, vector<1x32x128xbf16>
    %202 = vector.shape_cast %201 : vector<1x32x128xbf16> to vector<32x128xbf16>
    %cst_123 = arith.constant dense<0.000000e+00> : vector<8x128xf32>
    %203 = tpu.matmul %200, %202, %cst_123 {dimension_numbers = #tpu.dot_dimension_numbers<[1], [0], [0], [1], [0, 0, 1, 1], [], []>} : vector<8x32xbf16>, vector<32x128xbf16>, vector<8x128xf32> -> vector<8x128xf32>
    %c20 = arith.constant 20 : index
    %c0_124 = arith.constant 0 : index
    %204 = vector.load %arg4[%c20, %c0_124] : memref<25x128xf32, #tpu.memory_space<vmem>>, vector<1x128xf32>
    %205 = vector.broadcast %204 : vector<1x128xf32> to vector<8x128xf32>
    %206 = arith.addf %203, %205 : vector<8x128xf32>
    %cst_125 = arith.constant 0.000000e+00 : f32
    %207 = vector.broadcast %cst_125 : f32 to vector<8x128xf32>
    %208 = arith.maximumf %206, %207 : vector<8x128xf32>
    %209 = vector.extract_strided_slice %208 {offsets = [0, 0], sizes = [8, 32], strides = [1, 1]} : vector<8x128xf32> to vector<8x32xf32>
    %210 = arith.truncf %209 : vector<8x32xf32> to vector<8x32xbf16>
    %c20_126 = arith.constant 20 : index
    %c0_127 = arith.constant 0 : index
    %c0_128 = arith.constant 0 : index
    %211 = vector.load %arg3[%c20_126, %c0_127, %c0_128] : memref<24x32x128xbf16, #tpu.memory_space<vmem>>, vector<1x32x128xbf16>
    %212 = vector.shape_cast %211 : vector<1x32x128xbf16> to vector<32x128xbf16>
    %cst_129 = arith.constant dense<0.000000e+00> : vector<8x128xf32>
    %213 = tpu.matmul %210, %212, %cst_129 {dimension_numbers = #tpu.dot_dimension_numbers<[1], [0], [0], [1], [0, 0, 1, 1], [], []>} : vector<8x32xbf16>, vector<32x128xbf16>, vector<8x128xf32> -> vector<8x128xf32>
    %c21 = arith.constant 21 : index
    %c0_130 = arith.constant 0 : index
    %214 = vector.load %arg4[%c21, %c0_130] : memref<25x128xf32, #tpu.memory_space<vmem>>, vector<1x128xf32>
    %215 = vector.broadcast %214 : vector<1x128xf32> to vector<8x128xf32>
    %216 = arith.addf %213, %215 : vector<8x128xf32>
    %cst_131 = arith.constant 0.000000e+00 : f32
    %217 = vector.broadcast %cst_131 : f32 to vector<8x128xf32>
    %218 = arith.maximumf %216, %217 : vector<8x128xf32>
    %219 = vector.extract_strided_slice %218 {offsets = [0, 0], sizes = [8, 32], strides = [1, 1]} : vector<8x128xf32> to vector<8x32xf32>
    %220 = arith.truncf %219 : vector<8x32xf32> to vector<8x32xbf16>
    %c21_132 = arith.constant 21 : index
    %c0_133 = arith.constant 0 : index
    %c0_134 = arith.constant 0 : index
    %221 = vector.load %arg3[%c21_132, %c0_133, %c0_134] : memref<24x32x128xbf16, #tpu.memory_space<vmem>>, vector<1x32x128xbf16>
    %222 = vector.shape_cast %221 : vector<1x32x128xbf16> to vector<32x128xbf16>
    %cst_135 = arith.constant dense<0.000000e+00> : vector<8x128xf32>
    %223 = tpu.matmul %220, %222, %cst_135 {dimension_numbers = #tpu.dot_dimension_numbers<[1], [0], [0], [1], [0, 0, 1, 1], [], []>} : vector<8x32xbf16>, vector<32x128xbf16>, vector<8x128xf32> -> vector<8x128xf32>
    %c22 = arith.constant 22 : index
    %c0_136 = arith.constant 0 : index
    %224 = vector.load %arg4[%c22, %c0_136] : memref<25x128xf32, #tpu.memory_space<vmem>>, vector<1x128xf32>
    %225 = vector.broadcast %224 : vector<1x128xf32> to vector<8x128xf32>
    %226 = arith.addf %223, %225 : vector<8x128xf32>
    %cst_137 = arith.constant 0.000000e+00 : f32
    %227 = vector.broadcast %cst_137 : f32 to vector<8x128xf32>
    %228 = arith.maximumf %226, %227 : vector<8x128xf32>
    %229 = vector.extract_strided_slice %228 {offsets = [0, 0], sizes = [8, 32], strides = [1, 1]} : vector<8x128xf32> to vector<8x32xf32>
    %230 = arith.truncf %229 : vector<8x32xf32> to vector<8x32xbf16>
    %c22_138 = arith.constant 22 : index
    %c0_139 = arith.constant 0 : index
    %c0_140 = arith.constant 0 : index
    %231 = vector.load %arg3[%c22_138, %c0_139, %c0_140] : memref<24x32x128xbf16, #tpu.memory_space<vmem>>, vector<1x32x128xbf16>
    %232 = vector.shape_cast %231 : vector<1x32x128xbf16> to vector<32x128xbf16>
    %cst_141 = arith.constant dense<0.000000e+00> : vector<8x128xf32>
    %233 = tpu.matmul %230, %232, %cst_141 {dimension_numbers = #tpu.dot_dimension_numbers<[1], [0], [0], [1], [0, 0, 1, 1], [], []>} : vector<8x32xbf16>, vector<32x128xbf16>, vector<8x128xf32> -> vector<8x128xf32>
    %c23 = arith.constant 23 : index
    %c0_142 = arith.constant 0 : index
    %234 = vector.load %arg4[%c23, %c0_142] : memref<25x128xf32, #tpu.memory_space<vmem>>, vector<1x128xf32>
    %235 = vector.broadcast %234 : vector<1x128xf32> to vector<8x128xf32>
    %236 = arith.addf %233, %235 : vector<8x128xf32>
    %cst_143 = arith.constant 0.000000e+00 : f32
    %237 = vector.broadcast %cst_143 : f32 to vector<8x128xf32>
    %238 = arith.maximumf %236, %237 : vector<8x128xf32>
    %239 = vector.extract_strided_slice %238 {offsets = [0, 0], sizes = [8, 32], strides = [1, 1]} : vector<8x128xf32> to vector<8x32xf32>
    %240 = arith.truncf %239 : vector<8x32xf32> to vector<8x32xbf16>
    %c23_144 = arith.constant 23 : index
    %c0_145 = arith.constant 0 : index
    %c0_146 = arith.constant 0 : index
    %241 = vector.load %arg3[%c23_144, %c0_145, %c0_146] : memref<24x32x128xbf16, #tpu.memory_space<vmem>>, vector<1x32x128xbf16>
    %242 = vector.shape_cast %241 : vector<1x32x128xbf16> to vector<32x128xbf16>
    %cst_147 = arith.constant dense<0.000000e+00> : vector<8x128xf32>
    %243 = tpu.matmul %240, %242, %cst_147 {dimension_numbers = #tpu.dot_dimension_numbers<[1], [0], [0], [1], [0, 0, 1, 1], [], []>} : vector<8x32xbf16>, vector<32x128xbf16>, vector<8x128xf32> -> vector<8x128xf32>
    %c24 = arith.constant 24 : index
    %c0_148 = arith.constant 0 : index
    %244 = vector.load %arg4[%c24, %c0_148] : memref<25x128xf32, #tpu.memory_space<vmem>>, vector<1x128xf32>
    %245 = vector.broadcast %244 : vector<1x128xf32> to vector<8x128xf32>
    %246 = arith.addf %243, %245 : vector<8x128xf32>
    %c0_149 = arith.constant 0 : index
    %c0_150 = arith.constant 0 : index
    %247 = vector.load %arg5[%c0_149, %c0_150] : memref<8x128xf32, #tpu.memory_space<vmem>>, vector<8x128xf32>
    tpu.vector_store %arg5[%c0_149, %c0_150], %246 {strides = array<i32>} : memref<8x128xf32, #tpu.memory_space<vmem>>, vector<8x128xf32>,
    return
  }
  func.func @transform_0(%arg0: i32) -> (i32, i32) {
    %c0_i32 = arith.constant 0 : i32
    %c0_i32_0 = arith.constant 0 : i32
    return %arg0, %c0_i32 : i32, i32
  }
  func.func @transform_1(%arg0: i32) -> (i32, i32) {
    %c0_i32 = arith.constant 0 : i32
    %c0_i32_0 = arith.constant 0 : i32
    %c0_i32_1 = arith.constant 0 : i32
    return %c0_i32, %c0_i32_0 : i32, i32
  }
  func.func @transform_2(%arg0: i32) -> (i32, i32, i32) {
    %c0_i32 = arith.constant 0 : i32
    %c0_i32_0 = arith.constant 0 : i32
    %c0_i32_1 = arith.constant 0 : i32
    %c0_i32_2 = arith.constant 0 : i32
    return %c0_i32, %c0_i32_0, %c0_i32_1 : i32, i32, i32
  }
  func.func @transform_3(%arg0: i32) -> (i32, i32) {
    %c0_i32 = arith.constant 0 : i32
    %c0_i32_0 = arith.constant 0 : i32
    %c0_i32_1 = arith.constant 0 : i32
    return %c0_i32, %c0_i32_0 : i32, i32
  }
  func.func @transform_4(%arg0: i32) -> (i32, i32) {
    %c0_i32 = arith.constant 0 : i32
    %c0_i32_0 = arith.constant 0 : i32
    return %arg0, %c0_i32 : i32, i32
  }
}

</mosaic_0001>

<llo_original>
// kernel: tpu_custom_call.1
$region0: #{tpu_custom_call.1}
  #allocation0 [shape = 'u32[]', space=smem, size = 0x4, offset = 0x4, fixed_abs, tag = 'smem constant byte address 0x4 - core index']
  #allocation1 [shape = 'u32[144,128]{1,0:T(1,128)}', space=vmem, size = 0x12000, scoped, tag = 'internal scratch']
  %s0 = inlined_call_operand.hbm [shape: f32[8,32], index: 0, kind: input, shape index: {}]
  %s1 = inlined_call_operand.hbm [shape: bf16[32,128], index: 1, kind: input, shape index: {}]
  %s2 = inlined_call_operand.hbm [shape: bf16[24,32,128], index: 2, kind: input, shape index: {}]
  %s3 = inlined_call_operand.hbm [shape: f32[25,128], index: 3, kind: input, shape index: {}]
  %s4 = inlined_call_operand.hbm [shape: f32[8,128], index: 4, kind: output, shape index: {}]
  %s5 = sld [smem:[#allocation0]]
  $region42: #{tpu_custom_call.1} parent=0
    _
  %s7 = ssub.s32 1, %s5
  %s8 = scalar_select 0, %s7, %s5
  $region1: #{tpu_custom_call.1} parent=0
    #allocation2 [shape = 'u8[4096]{0}', space=vmem, size = 0x1000, scoped, tag = 'input window, operand 0, single buffered']
    #allocation3 [shape = 's32[1]{0}', space=sflag, size = 0x4, scoped, tag = 'scoped memory for tpu_custom_call.1']
    #allocation4 [shape = 's32[1]{0}', space=sflag, size = 0x4, scoped, tag = 'scoped memory for tpu_custom_call.1']
    #allocation5 [shape = 'u8[8192]{0}', space=vmem, size = 0x2000, scoped, tag = 'input window, operand 1, single buffered']
    #allocation6 [shape = 's32[1]{0}', space=sflag, size = 0x4, scoped, tag = 'scoped memory for tpu_custom_call.1']
    #allocation7 [shape = 'u8[196608]{0}', space=vmem, size = 0x30000, scoped, tag = 'input window, operand 2, single buffered']
    #allocation8 [shape = 'u8[16384]{0}', space=vmem, size = 0x4000, scoped, tag = 'input window, operand 3, single buffered']
    #allocation9 [shape = 's32[1]{0}', space=sflag, size = 0x4, scoped, tag = 'scoped memory for tpu_custom_call.1']
    #allocation10 [shape = 'u8[4096]{0}', space=vmem, size = 0x1000, scoped, tag = 'output window, operand 0, single buffered']
    %9 = vsyncpa [#allocation3], 0
    %10 = vsyncpa [#allocation6], 0
    %11 = vsyncpa [#allocation9], 0
    %12 = vsyncpa [#allocation4], 0
    // Predicated region
    $region2: #{tpu_custom_call.1} parent=1 // pred_check
      _
    $region3: #{tpu_custom_call.1} parent=1 // pred_check_branch
      %14 = sbr.rel (0) target = $region5
    $region4: #{tpu_custom_call.1} parent=1 // pred_region
      %s16 = ssub.s32 128, 128
      %17 = vsyncadd [#allocation3], %s16
      %s19 = sshll.u32 [#allocation2], 4
      %s20 = int_to_ptr.vmem [resolvable:$true] %s19
      %22 = dma.hbm_to_vmem [thread:$0]  %s0, 128, %s20, [#allocation3]
    $region5: #{tpu_custom_call.1} parent=1 // pred_fallthru
      _
    // Predicated region
    $region6: #{tpu_custom_call.1} parent=1 // pred_check
      _
    $region7: #{tpu_custom_call.1} parent=1 // pred_check_branch
      %24 = sbr.rel (0) target = $region9
    $region8: #{tpu_custom_call.1} parent=1 // pred_region
      %s26 = ssub.s32 256, 256
      %27 = vsyncadd [#allocation6], %s26
      %s28 = sshll.u32 [#allocation5], 4
      %s29 = int_to_ptr.vmem [resolvable:$true] %s28
      %34 = dma.hbm_to_vmem [thread:$0]  %s1, 256, %s29, [#allocation6], 64, 64, 4
    $region9: #{tpu_custom_call.1} parent=1 // pred_fallthru
      _
    // Predicated region
    $region10: #{tpu_custom_call.1} parent=1 // pred_check
      _
    $region11: #{tpu_custom_call.1} parent=1 // pred_check_branch
      %36 = sbr.rel (0) target = $region13
    $region12: #{tpu_custom_call.1} parent=1 // pred_region
      %s38 = ssub.s32 6144, 6144
      %39 = vsyncadd [#allocation6], %s38
      %s40 = sshll.u32 [#allocation7], 4
      %s41 = int_to_ptr.vmem [resolvable:$true] %s40
      %46 = dma.hbm_to_vmem [thread:$0]  %s2, 6144, %s41, [#allocation6], 64, 64, 4
    $region13: #{tpu_custom_call.1} parent=1 // pred_fallthru
      _
    // Predicated region
    $region14: #{tpu_custom_call.1} parent=1 // pred_check
      _
    $region15: #{tpu_custom_call.1} parent=1 // pred_check_branch
      %48 = sbr.rel (0) target = $region17
    $region16: #{tpu_custom_call.1} parent=1 // pred_region
      %s50 = ssub.s32 512, 512
      %51 = vsyncadd [#allocation9], %s50
      %s52 = sshll.u32 [#allocation8], 4
      %s53 = int_to_ptr.vmem [resolvable:$true] %s52
      %58 = dma.hbm_to_vmem [thread:$0]  %s3, 512, %s53, [#allocation9], 128, 128, 8
    $region17: #{tpu_custom_call.1} parent=1 // pred_fallthru
      _
    // Predicated region
    $region18: #{tpu_custom_call.1} parent=1 // pred_check
      _
    $region19: #{tpu_custom_call.1} parent=1 // pred_check_branch
      %60 = sbr.rel (0) target = $region21
    $region20: #{tpu_custom_call.1} parent=1 // pred_region
      %61 = dma.done [#allocation3], 128
    $region21: #{tpu_custom_call.1} parent=1 // pred_fallthru
      _
    // Predicated region
    $region22: #{tpu_custom_call.1} parent=1 // pred_check
      _
    $region23: #{tpu_custom_call.1} parent=1 // pred_check_branch
      %63 = sbr.rel (0) target = $region25
    $region24: #{tpu_custom_call.1} parent=1 // pred_region
      %64 = dma.done [#allocation6], 256
    $region25: #{tpu_custom_call.1} parent=1 // pred_fallthru
      _
    // Predicated region
    $region26: #{tpu_custom_call.1} parent=1 // pred_check
      _
    $region27: #{tpu_custom_call.1} parent=1 // pred_check_branch
      %66 = sbr.rel (0) target = $region29
    $region28: #{tpu_custom_call.1} parent=1 // pred_region
      %67 = dma.done [#allocation6], 6144
    $region29: #{tpu_custom_call.1} parent=1 // pred_fallthru
      _
    // Predicated region
    $region30: #{tpu_custom_call.1} parent=1 // pred_check
      _
    $region31: #{tpu_custom_call.1} parent=1 // pred_check_branch
      %69 = sbr.rel (0) target = $region33
    $region32: #{tpu_custom_call.1} parent=1 // pred_region
      %70 = dma.done [#allocation9], 512
    $region33: #{tpu_custom_call.1} parent=1 // pred_fallthru
      _
    %v72 = vld [vmem:[#allocation2] sm:$0xff]
    %v73 = vpack.c.bf16 %v72, %v72
    %v74 = vld [vmem:[#allocation5] sm:$0xf]
    %v75 = vld [vmem:[#allocation5 + $0x4] sm:$0xf]
    %v76 = vld [vmem:[#allocation5 + $0x8] sm:$0xf]
    %v77 = vld [vmem:[#allocation5 + $0xc] sm:$0xf]
    %v78 = vld [vmem:[#allocation8] sm:$0x1]
    %v79 = vlaneseq
    %v80 = vshrl.u32 %v79, 7
    %v81 = vsub.s32 0, %v80
    %v82 = vrot.slane %v78, %v81
    %v87 = vunpack.c.l.b16 %v74
    %v88 = vunpack.c.l.b16 %v75
    %v89 = vunpack.c.l.b16 %v76
    %v90 = vunpack.c.l.b16 %v77
    %v91 = vpack.c.b16 %v88, %v87
    %v92 = vpack.c.b16 %v90, %v89
    %vm95 = vcmask 261120
    %v97 = vsel %vm95, %v73, 0
    %99 = vmatprep.subr.bf16.mxu0 0
    %100 = vmatpush1.bf16.msra.mxu0 %v91
    %101 = vmatprep.subr.bf16.mxu0 0
    %102 = vmatpush1.bf16.msra.mxu0 %v92
    %103 = vmatprep.subr.bf16.mxu0 0
    %104 = vmatpush1.bf16.msra.mxu0 0
    %105 = vmatprep.subr.bf16.mxu0 0
    %106 = vmatpush1.bf16.msra.mxu0 0
    %107 = vmatprep.subr.bf16.mxu0 0
    %108 = vmatpush1.bf16.msra.mxu0 0
    %109 = vmatprep.subr.bf16.mxu0 0
    %110 = vmatpush1.bf16.msra.mxu0 0
    %111 = vmatprep.subr.bf16.mxu0 0
    %112 = vmatpush1.bf16.msra.mxu0 0
    %113 = vmatprep.subr.bf16.mxu0 0
    %114 = vmatpush1.bf16.msra.mxu0 0
    %115 = vmatprep.subr.bf16.mxu0 0
    %116 = vmatpush1.bf16.msra.mxu0 0
    %117 = vmatprep.subr.bf16.mxu0 0
    %118 = vmatpush1.bf16.msra.mxu0 0
    %119 = vmatprep.subr.bf16.mxu0 0
    %120 = vmatpush1.bf16.msra.mxu0 0
    %121 = vmatprep.subr.bf16.mxu0 0
    %122 = vmatpush1.bf16.msra.mxu0 0
    %123 = vmatprep.subr.bf16.mxu0 0
    %124 = vmatpush1.bf16.msra.mxu0 0
    %125 = vmatprep.subr.bf16.mxu0 0
    %126 = vmatpush1.bf16.msra.mxu0 0
    %127 = vmatprep.subr.bf16.mxu0 0
    %128 = vmatpush1.bf16.msra.mxu0 0
    %129 = vmatprep.subr.bf16.mxu0 0
    %130 = vmatpush1.bf16.msra.mxu0 0
    %131 = vmatprep.mubr.bf16.mxu0 0
    %132 = vmatmul.mubr.bf16.gmra.mrb[0].mxu0 %v97
    %v133 = vpop.f32.mrb[0].mxu0
    %v134 = vadd.f32 %v82, %v133
    %v135 = vpop.f32.mrb[0].mxu0
    %v136 = vpop.f32.mrb[0].mxu0
    %v137 = vpop.f32.mrb[0].mxu0
    %138 = vdwg.mxu0
    %v139 = vmax.f32 %v134, 0.0
    %v140 = vpack.c.bf16 %v139, %v139
    %v141 = vld [vmem:[#allocation7] sm:$0xf]
    %v142 = vld [vmem:[#allocation7 + $0x4] sm:$0xf]
    %v143 = vld [vmem:[#allocation7 + $0x8] sm:$0xf]
    %v144 = vld [vmem:[#allocation7 + $0xc] sm:$0xf]
    %v145 = vld [vmem:[#allocation8 + $0x1] sm:$0x1]
    %v146 = vlaneseq
    %v147 = vshrl.u32 %v146, 7
    %v148 = vsub.s32 0, %v147
    %v149 = vrot.slane %v145, %v148
    %v154 = vunpack.c.l.b16 %v141
    %v155 = vunpack.c.l.b16 %v142
    %v156 = vunpack.c.l.b16 %v143
    %v157 = vunpack.c.l.b16 %v144
    %v158 = vpack.c.b16 %v155, %v154
    %v159 = vpack.c.b16 %v157, %v156
    %v163 = vsel %vm95, %v140, 0
    %165 = vmatprep.subr.bf16.mxu0 0
    %166 = vmatpush1.bf16.msra.mxu0 %v158
    %167 = vmatprep.subr.bf16.mxu0 0
    %168 = vmatpush1.bf16.msra.mxu0 %v159
    %169 = vmatprep.subr.bf16.mxu0 0
    %170 = vmatpush1.bf16.msra.mxu0 0
    %171 = vmatprep.subr.bf16.mxu0 0
    %172 = vmatpush1.bf16.msra.mxu0 0
    %173 = vmatprep.subr.bf16.mxu0 0
    %174 = vmatpush1.bf16.msra.mxu0 0
    %175 = vmatprep.subr.bf16.mxu0 0
    %176 = vmatpush1.bf16.msra.mxu0 0
    %177 = vmatprep.subr.bf16.mxu0 0
    %178 = vmatpush1.bf16.msra.mxu0 0
    %179 = vmatprep.subr.bf16.mxu0 0
    %180 = vmatpush1.bf16.msra.mxu0 0
    %181 = vmatprep.subr.bf16.mxu0 0
    %182 = vmatpush1.bf16.msra.mxu0 0
    %183 = vmatprep.subr.bf16.mxu0 0
    %184 = vmatpush1.bf16.msra.mxu0 0
    %185 = vmatprep.subr.bf16.mxu0 0
    %186 = vmatpush1.bf16.msra.mxu0 0
    %187 = vmatprep.subr.bf16.mxu0 0
    %188 = vmatpush1.bf16.msra.mxu0 0
    %189 = vmatprep.subr.bf16.mxu0 0
    %190 = vmatpush1.bf16.msra.mxu0 0
    %191 = vmatprep.subr.bf16.mxu0 0
    %192 = vmatpush1.bf16.msra.mxu0 0
    %193 = vmatprep.subr.bf16.mxu0 0
    %194 = vmatpush1.bf16.msra.mxu0 0
    %195 = vmatprep.subr.bf16.mxu0 0
    %196 = vmatpush1.bf16.msra.mxu0 0
    %197 = vmatprep.mubr.bf16.mxu0 0
    %198 = vmatmul.mubr.bf16.gmra.mrb[0].mxu0 %v163
    %v199 = vpop.f32.mrb[0].mxu0
    %v200 = vadd.f32 %v149, %v199
    %v201 = vpop.f32.mrb[0].mxu0
    %v202 = vpop.f32.mrb[0].mxu0
    %v203 = vpop.f32.mrb[0].mxu0
    %204 = vdwg.mxu0
    %v205 = vmax.f32 %v200, 0.0
    %v206 = vpack.c.bf16 %v205, %v205
    %s207 = scalar_lea.vmem [#allocation7], 16
    %v208 = vld [vmem:[%s207] sm:$0xf]
    %v209 = vld [vmem:[%s207 + $0x4] sm:$0xf]
    %v210 = vld [vmem:[%s207 + $0x8] sm:$0xf]
    %v211 = vld [vmem:[%s207 + $0xc] sm:$0xf]
    %v212 = vld [vmem:[#allocation8 + $0x2] sm:$0x1]
    %v213 = vlaneseq
    %v214 = vshrl.u32 %v213, 7
    %v215 = vsub.s32 0, %v214
    %v216 = vrot.slane %v212, %v215
    %v221 = vunpack.c.l.b16 %v208
    %v222 = vunpack.c.l.b16 %v209
    %v223 = vunpack.c.l.b16 %v210
    %v224 = vunpack.c.l.b16 %v211
    %v225 = vpack.c.b16 %v222, %v221
    %v226 = vpack.c.b16 %v224, %v223
    %v230 = vsel %vm95, %v206, 0
    %232 = vmatprep.subr.bf16.mxu0 0
    %233 = vmatpush1.bf16.msra.mxu0 %v225
    %234 = vmatprep.subr.bf16.mxu0 0
    %235 = vmatpush1.bf16.msra.mxu0 %v226
    %236 = vmatprep.subr.bf16.mxu0 0
    %237 = vmatpush1.bf16.msra.mxu0 0
    %238 = vmatprep.subr.bf16.mxu0 0
    %239 = vmatpush1.bf16.msra.mxu0 0
    %240 = vmatprep.subr.bf16.mxu0 0
    %241 = vmatpush1.bf16.msra.mxu0 0
    %242 = vmatprep.subr.bf16.mxu0 0
    %243 = vmatpush1.bf16.msra.mxu0 0
    %244 = vmatprep.subr.bf16.mxu0 0
    %245 = vmatpush1.bf16.msra.mxu0 0
    %246 = vmatprep.subr.bf16.mxu0 0
    %247 = vmatpush1.bf16.msra.mxu0 0
    %248 = vmatprep.subr.bf16.mxu0 0
    %249 = vmatpush1.bf16.msra.mxu0 0
    %250 = vmatprep.subr.bf16.mxu0 0
    %251 = vmatpush1.bf16.msra.mxu0 0
    %252 = vmatprep.subr.bf16.mxu0 0
    %253 = vmatpush1.bf16.msra.mxu0 0
    %254 = vmatprep.subr.bf16.mxu0 0
    %255 = vmatpush1.bf16.msra.mxu0 0
    %256 = vmatprep.subr.bf16.mxu0 0
    %257 = vmatpush1.bf16.msra.mxu0 0
    %258 = vmatprep.subr.bf16.mxu0 0
    %259 = vmatpush1.bf16.msra.mxu0 0
    %260 = vmatprep.subr.bf16.mxu0 0
    %261 = vmatpush1.bf16.msra.mxu0 0
    %262 = vmatprep.subr.bf16.mxu0 0
    %263 = vmatpush1.bf16.msra.mxu0 0
    %264 = vmatprep.mubr.bf16.mxu0 0
    %265 = vmatmul.mubr.bf16.gmra.mrb[0].mxu0 %v230
    %v266 = vpop.f32.mrb[0].mxu0
    %v267 = vadd.f32 %v216, %v266
    %v268 = vpop.f32.mrb[0].mxu0
    %v269 = vpop.f32.mrb[0].mxu0
    %v270 = vpop.f32.mrb[0].mxu0
    %271 = vdwg.mxu0
    %v272 = vmax.f32 %v267, 0.0
    %v273 = vpack.c.bf16 %v272, %v272
    %s274 = scalar_lea.vmem [#allocation7], 32
    %v275 = vld [vmem:[%s274] sm:$0xf]
    %v276 = vld [vmem:[%s274 + $0x4] sm:$0xf]
    %v277 = vld [vmem:[%s274 + $0x8] sm:$0xf]
    %v278 = vld [vmem:[%s274 + $0xc] sm:$0xf]
    %v279 = vld [vmem:[#allocation8 + $0x3] sm:$0x1]
    %v280 = vlaneseq
    %v281 = vshrl.u32 %v280, 7
    %v282 = vsub.s32 0, %v281
    %v283 = vrot.slane %v279, %v282
    %v288 = vunpack.c.l.b16 %v275
    %v289 = vunpack.c.l.b16 %v276
    %v290 = vunpack.c.l.b16 %v277
    %v291 = vunpack.c.l.b16 %v278
    %v292 = vpack.c.b16 %v289, %v288
    %v293 = vpack.c.b16 %v291, %v290
    %v297 = vsel %vm95, %v273, 0
    %299 = vmatprep.subr.bf16.mxu0 0
    %300 = vmatpush1.bf16.msra.mxu0 %v292
    %301 = vmatprep.subr.bf16.mxu0 0
    %302 = vmatpush1.bf16.msra.mxu0 %v293
    %303 = vmatprep.subr.bf16.mxu0 0
    %304 = vmatpush1.bf16.msra.mxu0 0
    %305 = vmatprep.subr.bf16.mxu0 0
    %306 = vmatpush1.bf16.msra.mxu0 0
    %307 = vmatprep.subr.bf16.mxu0 0
    %308 = vmatpush1.bf16.msra.mxu0 0
    %309 = vmatprep.subr.bf16.mxu0 0
    %310 = vmatpush1.bf16.msra.mxu0 0
    %311 = vmatprep.subr.bf16.mxu0 0
    %312 = vmatpush1.bf16.msra.mxu0 0
    %313 = vmatprep.subr.bf16.mxu0 0
    %314 = vmatpush1.bf16.msra.mxu0 0
    %315 = vmatprep.subr.bf16.mxu0 0
    %316 = vmatpush1.bf16.msra.mxu0 0
    %317 = vmatprep.subr.bf16.mxu0 0
    %318 = vmatpush1.bf16.msra.mxu0 0
    %319 = vmatprep.subr.bf16.mxu0 0
    %320 = vmatpush1.bf16.msra.mxu0 0
    %321 = vmatprep.subr.bf16.mxu0 0
    %322 = vmatpush1.bf16.msra.mxu0 0
    %323 = vmatprep.subr.bf16.mxu0 0
    %324 = vmatpush1.bf16.msra.mxu0 0
    %325 = vmatprep.subr.bf16.mxu0 0
    %326 = vmatpush1.bf16.msra.mxu0 0
    %327 = vmatprep.subr.bf16.mxu0 0
    %328 = vmatpush1.bf16.msra.mxu0 0
    %329 = vmatprep.subr.bf16.mxu0 0
    %330 = vmatpush1.bf16.msra.mxu0 0
    %331 = vmatprep.mubr.bf16.mxu0 0
    %332 = vmatmul.mubr.bf16.gmra.mrb[0].mxu0 %v297
    %v333 = vpop.f32.mrb[0].mxu0
    %v334 = vadd.f32 %v283, %v333
    %v335 = vpop.f32.mrb[0].mxu0
    %v336 = vpop.f32.mrb[0].mxu0
    %v337 = vpop.f32.mrb[0].mxu0
    %338 = vdwg.mxu0
    %v339 = vmax.f32 %v334, 0.0
    %v340 = vpack.c.bf16 %v339, %v339
    %s341 = scalar_lea.vmem [#allocation7], 48
    %v342 = vld [vmem:[%s341] sm:$0xf]
    %v343 = vld [vmem:[%s341 + $0x4] sm:$0xf]
    %v344 = vld [vmem:[%s341 + $0x8] sm:$0xf]
    %v345 = vld [vmem:[%s341 + $0xc] sm:$0xf]
    %v346 = vld [vmem:[#allocation8 + $0x4] sm:$0x1]
    %v347 = vlaneseq
    %v348 = vshrl.u32 %v347, 7
    %v349 = vsub.s32 0, %v348
    %v350 = vrot.slane %v346, %v349
    %v355 = vunpack.c.l.b16 %v342
    %v356 = vunpack.c.l.b16 %v343
    %v357 = vunpack.c.l.b16 %v344
    %v358 = vunpack.c.l.b16 %v345
    %v359 = vpack.c.b16 %v356, %v355
    %v360 = vpack.c.b16 %v358, %v357
    %v364 = vsel %vm95, %v340, 0
    %366 = vmatprep.subr.bf16.mxu0 0
    %367 = vmatpush1.bf16.msra.mxu0 %v359
    %368 = vmatprep.subr.bf16.mxu0 0
    %369 = vmatpush1.bf16.msra.mxu0 %v360
    %370 = vmatprep.subr.bf16.mxu0 0
    %371 = vmatpush1.bf16.msra.mxu0 0
    %372 = vmatprep.subr.bf16.mxu0 0
    %373 = vmatpush1.bf16.msra.mxu0 0
    %374 = vmatprep.subr.bf16.mxu0 0
    %375 = vmatpush1.bf16.msra.mxu0 0
    %376 = vmatprep.subr.bf16.mxu0 0
    %377 = vmatpush1.bf16.msra.mxu0 0
    %378 = vmatprep.subr.bf16.mxu0 0
    %379 = vmatpush1.bf16.msra.mxu0 0
    %380 = vmatprep.subr.bf16.mxu0 0
    %381 = vmatpush1.bf16.msra.mxu0 0
    %382 = vmatprep.subr.bf16.mxu0 0
    %383 = vmatpush1.bf16.msra.mxu0 0
    %384 = vmatprep.subr.bf16.mxu0 0
    %385 = vmatpush1.bf16.msra.mxu0 0
    %386 = vmatprep.subr.bf16.mxu0 0
    %387 = vmatpush1.bf16.msra.mxu0 0
    %388 = vmatprep.subr.bf16.mxu0 0
    %389 = vmatpush1.bf16.msra.mxu0 0
    %390 = vmatprep.subr.bf16.mxu0 0
    %391 = vmatpush1.bf16.msra.mxu0 0
    %392 = vmatprep.subr.bf16.mxu0 0
    %393 = vmatpush1.bf16.msra.mxu0 0
    %394 = vmatprep.subr.bf16.mxu0 0
    %395 = vmatpush1.bf16.msra.mxu0 0
    %396 = vmatprep.subr.bf16.mxu0 0
    %397 = vmatpush1.bf16.msra.mxu0 0
    %398 = vmatprep.mubr.bf16.mxu0 0
    %399 = vmatmul.mubr.bf16.gmra.mrb[0].mxu0 %v364
    %v400 = vpop.f32.mrb[0].mxu0
    %v401 = vadd.f32 %v350, %v400
    %v402 = vpop.f32.mrb[0].mxu0
    %v403 = vpop.f32.mrb[0].mxu0
    %v404 = vpop.f32.mrb[0].mxu0
    %405 = vdwg.mxu0
    %v406 = vmax.f32 %v401, 0.0
    %v407 = vpack.c.bf16 %v406, %v406
    %s408 = scalar_lea.vmem [#allocation7], 64
    %v409 = vld [vmem:[%s408] sm:$0xf]
    %v410 = vld [vmem:[%s408 + $0x4] sm:$0xf]
    %v411 = vld [vmem:[%s408 + $0x8] sm:$0xf]
    %v412 = vld [vmem:[%s408 + $0xc] sm:$0xf]
    %v413 = vld [vmem:[#allocation8 + $0x5] sm:$0x1]
    %v414 = vlaneseq
    %v415 = vshrl.u32 %v414, 7
    %v416 = vsub.s32 0, %v415
    %v417 = vrot.slane %v413, %v416
    %v422 = vunpack.c.l.b16 %v409
    %v423 = vunpack.c.l.b16 %v410
    %v424 = vunpack.c.l.b16 %v411
    %v425 = vunpack.c.l.b16 %v412
    %v426 = vpack.c.b16 %v423, %v422
    %v427 = vpack.c.b16 %v425, %v424
    %v431 = vsel %vm95, %v407, 0
    %433 = vmatprep.subr.bf16.mxu0 0
    %434 = vmatpush1.bf16.msra.mxu0 %v426
    %435 = vmatprep.subr.bf16.mxu0 0
    %436 = vmatpush1.bf16.msra.mxu0 %v427
    %437 = vmatprep.subr.bf16.mxu0 0
    %438 = vmatpush1.bf16.msra.mxu0 0
    %439 = vmatprep.subr.bf16.mxu0 0
    %440 = vmatpush1.bf16.msra.mxu0 0
    %441 = vmatprep.subr.bf16.mxu0 0
    %442 = vmatpush1.bf16.msra.mxu0 0
    %443 = vmatprep.subr.bf16.mxu0 0
    %444 = vmatpush1.bf16.msra.mxu0 0
    %445 = vmatprep.subr.bf16.mxu0 0
    %446 = vmatpush1.bf16.msra.mxu0 0
    %447 = vmatprep.subr.bf16.mxu0 0
    %448 = vmatpush1.bf16.msra.mxu0 0
    %449 = vmatprep.subr.bf16.mxu0 0
    %450 = vmatpush1.bf16.msra.mxu0 0
    %451 = vmatprep.subr.bf16.mxu0 0
    %452 = vmatpush1.bf16.msra.mxu0 0
    %453 = vmatprep.subr.bf16.mxu0 0
    %454 = vmatpush1.bf16.msra.mxu0 0
    %455 = vmatprep.subr.bf16.mxu0 0
    %456 = vmatpush1.bf16.msra.mxu0 0
    %457 = vmatprep.subr.bf16.mxu0 0
    %458 = vmatpush1.bf16.msra.mxu0 0
    %459 = vmatprep.subr.bf16.mxu0 0
    %460 = vmatpush1.bf16.msra.mxu0 0
    %461 = vmatprep.subr.bf16.mxu0 0
    %462 = vmatpush1.bf16.msra.mxu0 0
    %463 = vmatprep.subr.bf16.mxu0 0
    %464 = vmatpush1.bf16.msra.mxu0 0
    %465 = vmatprep.mubr.bf16.mxu0 0
    %466 = vmatmul.mubr.bf16.gmra.mrb[0].mxu0 %v431
    %v467 = vpop.f32.mrb[0].mxu0
    %v468 = vadd.f32 %v417, %v467
    %v469 = vpop.f32.mrb[0].mxu0
    %v470 = vpop.f32.mrb[0].mxu0
    %v471 = vpop.f32.mrb[0].mxu0
    %472 = vdwg.mxu0
    %v473 = vmax.f32 %v468, 0.0
    %v474 = vpack.c.bf16 %v473, %v473
    %s475 = scalar_lea.vmem [#allocation7], 80
    %v476 = vld [vmem:[%s475] sm:$0xf]
    %v477 = vld [vmem:[%s475 + $0x4] sm:$0xf]
    %v478 = vld [vmem:[%s475 + $0x8] sm:$0xf]
    %v479 = vld [vmem:[%s475 + $0xc] sm:$0xf]
    %v480 = vld [vmem:[#allocation8 + $0x6] sm:$0x1]
    %v481 = vlaneseq
    %v482 = vshrl.u32 %v481, 7
    %v483 = vsub.s32 0, %v482
    %v484 = vrot.slane %v480, %v483
    %v489 = vunpack.c.l.b16 %v476
    %v490 = vunpack.c.l.b16 %v477
    %v491 = vunpack.c.l.b16 %v478
    %v492 = vunpack.c.l.b16 %v479
    %v493 = vpack.c.b16 %v490, %v489
    %v494 = vpack.c.b16 %v492, %v491
    %v498 = vsel %vm95, %v474, 0
    %500 = vmatprep.subr.bf16.mxu0 0
    %501 = vmatpush1.bf16.msra.mxu0 %v493
    %502 = vmatprep.subr.bf16.mxu0 0
    %503 = vmatpush1.bf16.msra.mxu0 %v494
    %504 = vmatprep.subr.bf16.mxu0 0
    %505 = vmatpush1.bf16.msra.mxu0 0
    %506 = vmatprep.subr.bf16.mxu0 0
    %507 = vmatpush1.bf16.msra.mxu0 0
    %508 = vmatprep.subr.bf16.mxu0 0
    %509 = vmatpush1.bf16.msra.mxu0 0
    %510 = vmatprep.subr.bf16.mxu0 0
    %511 = vmatpush1.bf16.msra.mxu0 0
    %512 = vmatprep.subr.bf16.mxu0 0
    %513 = vmatpush1.bf16.msra.mxu0 0
    %514 = vmatprep.subr.bf16.mxu0 0
    %515 = vmatpush1.bf16.msra.mxu0 0
    %516 = vmatprep.subr.bf16.mxu0 0
    %517 = vmatpush1.bf16.msra.mxu0 0
    %518 = vmatprep.subr.bf16.mxu0 0
    %519 = vmatpush1.bf16.msra.mxu0 0
    %520 = vmatprep.subr.bf16.mxu0 0
    %521 = vmatpush1.bf16.msra.mxu0 0
    %522 = vmatprep.subr.bf16.mxu0 0
    %523 = vmatpush1.bf16.msra.mxu0 0
    %524 = vmatprep.subr.bf16.mxu0 0
    %525 = vmatpush1.bf16.msra.mxu0 0
    %526 = vmatprep.subr.bf16.mxu0 0
    %527 = vmatpush1.bf16.msra.mxu0 0
    %528 = vmatprep.subr.bf16.mxu0 0
    %529 = vmatpush1.bf16.msra.mxu0 0
    %530 = vmatprep.subr.bf16.mxu0 0
    %531 = vmatpush1.bf16.msra.mxu0 0
    %532 = vmatprep.mubr.bf16.mxu0 0
    %533 = vmatmul.mubr.bf16.gmra.mrb[0].mxu0 %v498
    %v534 = vpop.f32.mrb[0].mxu0
    %v535 = vadd.f32 %v484, %v534
    %v536 = vpop.f32.mrb[0].mxu0
    %v537 = vpop.f32.mrb[0].mxu0
    %v538 = vpop.f32.mrb[0].mxu0
    %539 = vdwg.mxu0
    %v540 = vmax.f32 %v535, 0.0
    %v541 = vpack.c.bf16 %v540, %v540
    %s542 = scalar_lea.vmem [#allocation7], 96
    %v543 = vld [vmem:[%s542] sm:$0xf]
    %v544 = vld [vmem:[%s542 + $0x4] sm:$0xf]
    %v545 = vld [vmem:[%s542 + $0x8] sm:$0xf]
    %v546 = vld [vmem:[%s542 + $0xc] sm:$0xf]
    %v547 = vld [vmem:[#allocation8 + $0x7] sm:$0x1]
    %v548 = vlaneseq
    %v549 = vshrl.u32 %v548, 7
    %v550 = vsub.s32 0, %v549
    %v551 = vrot.slane %v547, %v550
    %v556 = vunpack.c.l.b16 %v543
    %v557 = vunpack.c.l.b16 %v544
    %v558 = vunpack.c.l.b16 %v545
    %v559 = vunpack.c.l.b16 %v546
    %v560 = vpack.c.b16 %v557, %v556
    %v561 = vpack.c.b16 %v559, %v558
    %v565 = vsel %vm95, %v541, 0
    %567 = vmatprep.subr.bf16.mxu0 0
    %568 = vmatpush1.bf16.msra.mxu0 %v560
    %569 = vmatprep.subr.bf16.mxu0 0
    %570 = vmatpush1.bf16.msra.mxu0 %v561
    %571 = vmatprep.subr.bf16.mxu0 0
    %572 = vmatpush1.bf16.msra.mxu0 0
    %573 = vmatprep.subr.bf16.mxu0 0
    %574 = vmatpush1.bf16.msra.mxu0 0
    %575 = vmatprep.subr.bf16.mxu0 0
    %576 = vmatpush1.bf16.msra.mxu0 0
    %577 = vmatprep.subr.bf16.mxu0 0
    %578 = vmatpush1.bf16.msra.mxu0 0
    %579 = vmatprep.subr.bf16.mxu0 0
    %580 = vmatpush1.bf16.msra.mxu0 0
    %581 = vmatprep.subr.bf16.mxu0 0
    %582 = vmatpush1.bf16.msra.mxu0 0
    %583 = vmatprep.subr.bf16.mxu0 0
    %584 = vmatpush1.bf16.msra.mxu0 0
    %585 = vmatprep.subr.bf16.mxu0 0
    %586 = vmatpush1.bf16.msra.mxu0 0
    %587 = vmatprep.subr.bf16.mxu0 0
    %588 = vmatpush1.bf16.msra.mxu0 0
    %589 = vmatprep.subr.bf16.mxu0 0
    %590 = vmatpush1.bf16.msra.mxu0 0
    %591 = vmatprep.subr.bf16.mxu0 0
    %592 = vmatpush1.bf16.msra.mxu0 0
    %593 = vmatprep.subr.bf16.mxu0 0
    %594 = vmatpush1.bf16.msra.mxu0 0
    %595 = vmatprep.subr.bf16.mxu0 0
    %596 = vmatpush1.bf16.msra.mxu0 0
    %597 = vmatprep.subr.bf16.mxu0 0
    %598 = vmatpush1.bf16.msra.mxu0 0
    %599 = vmatprep.mubr.bf16.mxu0 0
    %600 = vmatmul.mubr.bf16.gmra.mrb[0].mxu0 %v565
    %v601 = vpop.f32.mrb[0].mxu0
    %v602 = vadd.f32 %v551, %v601
    %v603 = vpop.f32.mrb[0].mxu0
    %v604 = vpop.f32.mrb[0].mxu0
    %v605 = vpop.f32.mrb[0].mxu0
    %606 = vdwg.mxu0
    %v607 = vmax.f32 %v602, 0.0
    %v608 = vpack.c.bf16 %v607, %v607
    %s609 = scalar_lea.vmem [#allocation7], 112
    %v610 = vld [vmem:[%s609] sm:$0xf]
    %v611 = vld [vmem:[%s609 + $0x4] sm:$0xf]
    %v612 = vld [vmem:[%s609 + $0x8] sm:$0xf]
    %v613 = vld [vmem:[%s609 + $0xc] sm:$0xf]
    %v614 = vld [vmem:[#allocation8 + $0x8] sm:$0x1]
    %v615 = vlaneseq
    %v616 = vshrl.u32 %v615, 7
    %v617 = vsub.s32 0, %v616
    %v618 = vrot.slane %v614, %v617
    %v623 = vunpack.c.l.b16 %v610
    %v624 = vunpack.c.l.b16 %v611
    %v625 = vunpack.c.l.b16 %v612
    %v626 = vunpack.c.l.b16 %v613
    %v627 = vpack.c.b16 %v624, %v623
    %v628 = vpack.c.b16 %v626, %v625
    %v632 = vsel %vm95, %v608, 0
    %634 = vmatprep.subr.bf16.mxu0 0
    %635 = vmatpush1.bf16.msra.mxu0 %v627
    %636 = vmatprep.subr.bf16.mxu0 0
    %637 = vmatpush1.bf16.msra.mxu0 %v628
    %638 = vmatprep.subr.bf16.mxu0 0
    %639 = vmatpush1.bf16.msra.mxu0 0
    %640 = vmatprep.subr.bf16.mxu0 0
    %641 = vmatpush1.bf16.msra.mxu0 0
    %642 = vmatprep.subr.bf16.mxu0 0
    %643 = vmatpush1.bf16.msra.mxu0 0
    %644 = vmatprep.subr.bf16.mxu0 0
    %645 = vmatpush1.bf16.msra.mxu0 0
    %646 = vmatprep.subr.bf16.mxu0 0
    %647 = vmatpush1.bf16.msra.mxu0 0
    %648 = vmatprep.subr.bf16.mxu0 0
    %649 = vmatpush1.bf16.msra.mxu0 0
    %650 = vmatprep.subr.bf16.mxu0 0
    %651 = vmatpush1.bf16.msra.mxu0 0
    %652 = vmatprep.subr.bf16.mxu0 0
    %653 = vmatpush1.bf16.msra.mxu0 0
    %654 = vmatprep.subr.bf16.mxu0 0
    %655 = vmatpush1.bf16.msra.mxu0 0
    %656 = vmatprep.subr.bf16.mxu0 0
    %657 = vmatpush1.bf16.msra.mxu0 0
    %658 = vmatprep.subr.bf16.mxu0 0
    %659 = vmatpush1.bf16.msra.mxu0 0
    %660 = vmatprep.subr.bf16.mxu0 0
    %661 = vmatpush1.bf16.msra.mxu0 0
    %662 = vmatprep.subr.bf16.mxu0 0
    %663 = vmatpush1.bf16.msra.mxu0 0
    %664 = vmatprep.subr.bf16.mxu0 0
    %665 = vmatpush1.bf16.msra.mxu0 0
    %666 = vmatprep.mubr.bf16.mxu0 0
    %667 = vmatmul.mubr.bf16.gmra.mrb[0].mxu0 %v632
    %v668 = vpop.f32.mrb[0].mxu0
    %v669 = vadd.f32 %v618, %v668
    %v670 = vpop.f32.mrb[0].mxu0
    %v671 = vpop.f32.mrb[0].mxu0
    %v672 = vpop.f32.mrb[0].mxu0
    %673 = vdwg.mxu0
    %v674 = vmax.f32 %v669, 0.0
    %v675 = vpack.c.bf16 %v674, %v674
    %s676 = scalar_lea.vmem [#allocation7], 128
    %v677 = vld [vmem:[%s676] sm:$0xf]
    %v678 = vld [vmem:[%s676 + $0x4] sm:$0xf]
    %v679 = vld [vmem:[%s676 + $0x8] sm:$0xf]
    %v680 = vld [vmem:[%s676 + $0xc] sm:$0xf]
    %v681 = vld [vmem:[#allocation8 + $0x9] sm:$0x1]
    %v682 = vlaneseq
    %v683 = vshrl.u32 %v682, 7
    %v684 = vsub.s32 0, %v683
    %v685 = vrot.slane %v681, %v684
    %v690 = vunpack.c.l.b16 %v677
    %v691 = vunpack.c.l.b16 %v678
    %v692 = vunpack.c.l.b16 %v679
    %v693 = vunpack.c.l.b16 %v680
    %v694 = vpack.c.b16 %v691, %v690
    %v695 = vpack.c.b16 %v693, %v692
    %v699 = vsel %vm95, %v675, 0
    %701 = vmatprep.subr.bf16.mxu0 0
    %702 = vmatpush1.bf16.msra.mxu0 %v694
    %703 = vmatprep.subr.bf16.mxu0 0
    %704 = vmatpush1.bf16.msra.mxu0 %v695
    %705 = vmatprep.subr.bf16.mxu0 0
    %706 = vmatpush1.bf16.msra.mxu0 0
    %707 = vmatprep.subr.bf16.mxu0 0
    %708 = vmatpush1.bf16.msra.mxu0 0
    %709 = vmatprep.subr.bf16.mxu0 0
    %710 = vmatpush1.bf16.msra.mxu0 0
    %711 = vmatprep.subr.bf16.mxu0 0
    %712 = vmatpush1.bf16.msra.mxu0 0
    %713 = vmatprep.subr.bf16.mxu0 0
    %714 = vmatpush1.bf16.msra.mxu0 0
    %715 = vmatprep.subr.bf16.mxu0 0
    %716 = vmatpush1.bf16.msra.mxu0 0
    %717 = vmatprep.subr.bf16.mxu0 0
    %718 = vmatpush1.bf16.msra.mxu0 0
    %719 = vmatprep.subr.bf16.mxu0 0
    %720 = vmatpush1.bf16.msra.mxu0 0
    %721 = vmatprep.subr.bf16.mxu0 0
    %722 = vmatpush1.bf16.msra.mxu0 0
    %723 = vmatprep.subr.bf16.mxu0 0
    %724 = vmatpush1.bf16.msra.mxu0 0
    %725 = vmatprep.subr.bf16.mxu0 0
    %726 = vmatpush1.bf16.msra.mxu0 0
    %727 = vmatprep.subr.bf16.mxu0 0
    %728 = vmatpush1.bf16.msra.mxu0 0
    %729 = vmatprep.subr.bf16.mxu0 0
    %730 = vmatpush1.bf16.msra.mxu0 0
    %731 = vmatprep.subr.bf16.mxu0 0
    %732 = vmatpush1.bf16.msra.mxu0 0
    %733 = vmatprep.mubr.bf16.mxu0 0
    %734 = vmatmul.mubr.bf16.gmra.mrb[0].mxu0 %v699
    %v735 = vpop.f32.mrb[0].mxu0
    %v736 = vadd.f32 %v685, %v735
    %v737 = vpop.f32.mrb[0].mxu0
    %v738 = vpop.f32.mrb[0].mxu0
    %v739 = vpop.f32.mrb[0].mxu0
    %740 = vdwg.mxu0
    %v741 = vmax.f32 %v736, 0.0
    %v742 = vpack.c.bf16 %v741, %v741
    %s743 = scalar_lea.vmem [#allocation7], 144
    %v744 = vld [vmem:[%s743] sm:$0xf]
    %v745 = vld [vmem:[%s743 + $0x4] sm:$0xf]
    %v746 = vld [vmem:[%s743 + $0x8] sm:$0xf]
    %v747 = vld [vmem:[%s743 + $0xc] sm:$0xf]
    %v748 = vld [vmem:[#allocation8 + $0xa] sm:$0x1]
    %v749 = vlaneseq
    %v750 = vshrl.u32 %v749, 7
    %v751 = vsub.s32 0, %v750
    %v752 = vrot.slane %v748, %v751
    %v757 = vunpack.c.l.b16 %v744
    %v758 = vunpack.c.l.b16 %v745
    %v759 = vunpack.c.l.b16 %v746
    %v760 = vunpack.c.l.b16 %v747
    %v761 = vpack.c.b16 %v758, %v757
    %v762 = vpack.c.b16 %v760, %v759
    %v766 = vsel %vm95, %v742, 0
    %768 = vmatprep.subr.bf16.mxu0 0
    %769 = vmatpush1.bf16.msra.mxu0 %v761
    %770 = vmatprep.subr.bf16.mxu0 0
    %771 = vmatpush1.bf16.msra.mxu0 %v762
    %772 = vmatprep.subr.bf16.mxu0 0
    %773 = vmatpush1.bf16.msra.mxu0 0
    %774 = vmatprep.subr.bf16.mxu0 0
    %775 = vmatpush1.bf16.msra.mxu0 0
    %776 = vmatprep.subr.bf16.mxu0 0
    %777 = vmatpush1.bf16.msra.mxu0 0
    %778 = vmatprep.subr.bf16.mxu0 0
    %779 = vmatpush1.bf16.msra.mxu0 0
    %780 = vmatprep.subr.bf16.mxu0 0
    %781 = vmatpush1.bf16.msra.mxu0 0
    %782 = vmatprep.subr.bf16.mxu0 0
    %783 = vmatpush1.bf16.msra.mxu0 0
    %784 = vmatprep.subr.bf16.mxu0 0
    %785 = vmatpush1.bf16.msra.mxu0 0
    %786 = vmatprep.subr.bf16.mxu0 0
    %787 = vmatpush1.bf16.msra.mxu0 0
    %788 = vmatprep.subr.bf16.mxu0 0
    %789 = vmatpush1.bf16.msra.mxu0 0
    %790 = vmatprep.subr.bf16.mxu0 0
    %791 = vmatpush1.bf16.msra.mxu0 0
    %792 = vmatprep.subr.bf16.mxu0 0
    %793 = vmatpush1.bf16.msra.mxu0 0
    %794 = vmatprep.subr.bf16.mxu0 0
    %795 = vmatpush1.bf16.msra.mxu0 0
    %796 = vmatprep.subr.bf16.mxu0 0
    %797 = vmatpush1.bf16.msra.mxu0 0
    %798 = vmatprep.subr.bf16.mxu0 0
    %799 = vmatpush1.bf16.msra.mxu0 0
    %800 = vmatprep.mubr.bf16.mxu0 0
    %801 = vmatmul.mubr.bf16.gmra.mrb[0].mxu0 %v766
    %v802 = vpop.f32.mrb[0].mxu0
    %v803 = vadd.f32 %v752, %v802
    %v804 = vpop.f32.mrb[0].mxu0
    %v805 = vpop.f32.mrb[0].mxu0
    %v806 = vpop.f32.mrb[0].mxu0
    %807 = vdwg.mxu0
    %v808 = vmax.f32 %v803, 0.0
    %v809 = vpack.c.bf16 %v808, %v808
    %s810 = scalar_lea.vmem [#allocation7], 160
    %v811 = vld [vmem:[%s810] sm:$0xf]
    %v812 = vld [vmem:[%s810 + $0x4] sm:$0xf]
    %v813 = vld [vmem:[%s810 + $0x8] sm:$0xf]
    %v814 = vld [vmem:[%s810 + $0xc] sm:$0xf]
    %v815 = vld [vmem:[#allocation8 + $0xb] sm:$0x1]
    %v816 = vlaneseq
    %v817 = vshrl.u32 %v816, 7
    %v818 = vsub.s32 0, %v817
    %v819 = vrot.slane %v815, %v818
    %v824 = vunpack.c.l.b16 %v811
    %v825 = vunpack.c.l.b16 %v812
    %v826 = vunpack.c.l.b16 %v813
    %v827 = vunpack.c.l.b16 %v814
    %v828 = vpack.c.b16 %v825, %v824
    %v829 = vpack.c.b16 %v827, %v826
    %v833 = vsel %vm95, %v809, 0
    %835 = vmatprep.subr.bf16.mxu0 0
    %836 = vmatpush1.bf16.msra.mxu0 %v828
    %837 = vmatprep.subr.bf16.mxu0 0
    %838 = vmatpush1.bf16.msra.mxu0 %v829
    %839 = vmatprep.subr.bf16.mxu0 0
    %840 = vmatpush1.bf16.msra.mxu0 0
    %841 = vmatprep.subr.bf16.mxu0 0
    %842 = vmatpush1.bf16.msra.mxu0 0
    %843 = vmatprep.subr.bf16.mxu0 0
    %844 = vmatpush1.bf16.msra.mxu0 0
    %845 = vmatprep.subr.bf16.mxu0 0
    %846 = vmatpush1.bf16.msra.mxu0 0
    %847 = vmatprep.subr.bf16.mxu0 0
    %848 = vmatpush1.bf16.msra.mxu0 0
    %849 = vmatprep.subr.bf16.mxu0 0
    %850 = vmatpush1.bf16.msra.mxu0 0
    %851 = vmatprep.subr.bf16.mxu0 0
    %852 = vmatpush1.bf16.msra.mxu0 0
    %853 = vmatprep.subr.bf16.mxu0 0
    %854 = vmatpush1.bf16.msra.mxu0 0
    %855 = vmatprep.subr.bf16.mxu0 0
    %856 = vmatpush1.bf16.msra.mxu0 0
    %857 = vmatprep.subr.bf16.mxu0 0
    %858 = vmatpush1.bf16.msra.mxu0 0
    %859 = vmatprep.subr.bf16.mxu0 0
    %860 = vmatpush1.bf16.msra.mxu0 0
    %861 = vmatprep.subr.bf16.mxu0 0
    %862 = vmatpush1.bf16.msra.mxu0 0
    %863 = vmatprep.subr.bf16.mxu0 0
    %864 = vmatpush1.bf16.msra.mxu0 0
    %865 = vmatprep.subr.bf16.mxu0 0
    %866 = vmatpush1.bf16.msra.mxu0 0
    %867 = vmatprep.mubr.bf16.mxu0 0
    %868 = vmatmul.mubr.bf16.gmra.mrb[0].mxu0 %v833
    %v869 = vpop.f32.mrb[0].mxu0
    %v870 = vadd.f32 %v819, %v869
    %v871 = vpop.f32.mrb[0].mxu0
    %v872 = vpop.f32.mrb[0].mxu0
    %v873 = vpop.f32.mrb[0].mxu0
    %874 = vdwg.mxu0
    %v875 = vmax.f32 %v870, 0.0
    %v876 = vpack.c.bf16 %v875, %v875
    %s877 = scalar_lea.vmem [#allocation7], 176
    %v878 = vld [vmem:[%s877] sm:$0xf]
    %v879 = vld [vmem:[%s877 + $0x4] sm:$0xf]
    %v880 = vld [vmem:[%s877 + $0x8] sm:$0xf]
    %v881 = vld [vmem:[%s877 + $0xc] sm:$0xf]
    %v882 = vld [vmem:[#allocation8 + $0xc] sm:$0x1]
    %v883 = vlaneseq
    %v884 = vshrl.u32 %v883, 7
    %v885 = vsub.s32 0, %v884
    %v886 = vrot.slane %v882, %v885
    %v891 = vunpack.c.l.b16 %v878
    %v892 = vunpack.c.l.b16 %v879
    %v893 = vunpack.c.l.b16 %v880
    %v894 = vunpack.c.l.b16 %v881
    %v895 = vpack.c.b16 %v892, %v891
    %v896 = vpack.c.b16 %v894, %v893
    %v900 = vsel %vm95, %v876, 0
    %902 = vmatprep.subr.bf16.mxu0 0
    %903 = vmatpush1.bf16.msra.mxu0 %v895
    %904 = vmatprep.subr.bf16.mxu0 0
    %905 = vmatpush1.bf16.msra.mxu0 %v896
    %906 = vmatprep.subr.bf16.mxu0 0
    %907 = vmatpush1.bf16.msra.mxu0 0
    %908 = vmatprep.subr.bf16.mxu0 0
    %909 = vmatpush1.bf16.msra.mxu0 0
    %910 = vmatprep.subr.bf16.mxu0 0
    %911 = vmatpush1.bf16.msra.mxu0 0
    %912 = vmatprep.subr.bf16.mxu0 0
    %913 = vmatpush1.bf16.msra.mxu0 0
    %914 = vmatprep.subr.bf16.mxu0 0
    %915 = vmatpush1.bf16.msra.mxu0 0
    %916 = vmatprep.subr.bf16.mxu0 0
    %917 = vmatpush1.bf16.msra.mxu0 0
    %918 = vmatprep.subr.bf16.mxu0 0
    %919 = vmatpush1.bf16.msra.mxu0 0
    %920 = vmatprep.subr.bf16.mxu0 0
    %921 = vmatpush1.bf16.msra.mxu0 0
    %922 = vmatprep.subr.bf16.mxu0 0
    %923 = vmatpush1.bf16.msra.mxu0 0
    %924 = vmatprep.subr.bf16.mxu0 0
    %925 = vmatpush1.bf16.msra.mxu0 0
    %926 = vmatprep.subr.bf16.mxu0 0
    %927 = vmatpush1.bf16.msra.mxu0 0
    %928 = vmatprep.subr.bf16.mxu0 0
    %929 = vmatpush1.bf16.msra.mxu0 0
    %930 = vmatprep.subr.bf16.mxu0 0
    %931 = vmatpush1.bf16.msra.mxu0 0
    %932 = vmatprep.subr.bf16.mxu0 0
    %933 = vmatpush1.bf16.msra.mxu0 0
    %934 = vmatprep.mubr.bf16.mxu0 0
    %935 = vmatmul.mubr.bf16.gmra.mrb[0].mxu0 %v900
    %v936 = vpop.f32.mrb[0].mxu0
    %v937 = vadd.f32 %v886, %v936
    %v938 = vpop.f32.mrb[0].mxu0
    %v939 = vpop.f32.mrb[0].mxu0
    %v940 = vpop.f32.mrb[0].mxu0
    %941 = vdwg.mxu0
    %v942 = vmax.f32 %v937, 0.0
    %v943 = vpack.c.bf16 %v942, %v942
    %s944 = scalar_lea.vmem [#allocation7], 192
    %v945 = vld [vmem:[%s944] sm:$0xf]
    %v946 = vld [vmem:[%s944 + $0x4] sm:$0xf]
    %v947 = vld [vmem:[%s944 + $0x8] sm:$0xf]
    %v948 = vld [vmem:[%s944 + $0xc] sm:$0xf]
    %v949 = vld [vmem:[#allocation8 + $0xd] sm:$0x1]
    %v950 = vlaneseq
    %v951 = vshrl.u32 %v950, 7
    %v952 = vsub.s32 0, %v951
    %v953 = vrot.slane %v949, %v952
    %v958 = vunpack.c.l.b16 %v945
    %v959 = vunpack.c.l.b16 %v946
    %v960 = vunpack.c.l.b16 %v947
    %v961 = vunpack.c.l.b16 %v948
    %v962 = vpack.c.b16 %v959, %v958
    %v963 = vpack.c.b16 %v961, %v960
    %v967 = vsel %vm95, %v943, 0
    %969 = vmatprep.subr.bf16.mxu0 0
    %970 = vmatpush1.bf16.msra.mxu0 %v962
    %971 = vmatprep.subr.bf16.mxu0 0
    %972 = vmatpush1.bf16.msra.mxu0 %v963
    %973 = vmatprep.subr.bf16.mxu0 0
    %974 = vmatpush1.bf16.msra.mxu0 0
    %975 = vmatprep.subr.bf16.mxu0 0
    %976 = vmatpush1.bf16.msra.mxu0 0
    %977 = vmatprep.subr.bf16.mxu0 0
    %978 = vmatpush1.bf16.msra.mxu0 0
    %979 = vmatprep.subr.bf16.mxu0 0
    %980 = vmatpush1.bf16.msra.mxu0 0
    %981 = vmatprep.subr.bf16.mxu0 0
    %982 = vmatpush1.bf16.msra.mxu0 0
    %983 = vmatprep.subr.bf16.mxu0 0
    %984 = vmatpush1.bf16.msra.mxu0 0
    %985 = vmatprep.subr.bf16.mxu0 0
    %986 = vmatpush1.bf16.msra.mxu0 0
    %987 = vmatprep.subr.bf16.mxu0 0
    %988 = vmatpush1.bf16.msra.mxu0 0
    %989 = vmatprep.subr.bf16.mxu0 0
    %990 = vmatpush1.bf16.msra.mxu0 0
    %991 = vmatprep.subr.bf16.mxu0 0
    %992 = vmatpush1.bf16.msra.mxu0 0
    %993 = vmatprep.subr.bf16.mxu0 0
    %994 = vmatpush1.bf16.msra.mxu0 0
    %995 = vmatprep.subr.bf16.mxu0 0
    %996 = vmatpush1.bf16.msra.mxu0 0
    %997 = vmatprep.subr.bf16.mxu0 0
    %998 = vmatpush1.bf16.msra.mxu0 0
    %999 = vmatprep.subr.bf16.mxu0 0
    %1000 = vmatpush1.bf16.msra.mxu0 0
    %1001 = vmatprep.mubr.bf16.mxu0 0
    %1002 = vmatmul.mubr.bf16.gmra.mrb[0].mxu0 %v967
    %v1003 = vpop.f32.mrb[0].mxu0
    %v1004 = vadd.f32 %v953, %v1003
    %v1005 = vpop.f32.mrb[0].mxu0
    %v1006 = vpop.f32.mrb[0].mxu0
    %v1007 = vpop.f32.mrb[0].mxu0
    %1008 = vdwg.mxu0
    %v1009 = vmax.f32 %v1004, 0.0
    %v1010 = vpack.c.bf16 %v1009, %v1009
    %s1011 = scalar_lea.vmem [#allocation7], 208
    %v1012 = vld [vmem:[%s1011] sm:$0xf]
    %v1013 = vld [vmem:[%s1011 + $0x4] sm:$0xf]
    %v1014 = vld [vmem:[%s1011 + $0x8] sm:$0xf]
    %v1015 = vld [vmem:[%s1011 + $0xc] sm:$0xf]
    %v1016 = vld [vmem:[#allocation8 + $0xe] sm:$0x1]
    %v1017 = vlaneseq
    %v1018 = vshrl.u32 %v1017, 7
    %v1019 = vsub.s32 0, %v1018
    %v1020 = vrot.slane %v1016, %v1019
    %v1025 = vunpack.c.l.b16 %v1012
    %v1026 = vunpack.c.l.b16 %v1013
    %v1027 = vunpack.c.l.b16 %v1014
    %v1028 = vunpack.c.l.b16 %v1015
    %v1029 = vpack.c.b16 %v1026, %v1025
    %v1030 = vpack.c.b16 %v1028, %v1027
    %v1034 = vsel %vm95, %v1010, 0
    %1036 = vmatprep.subr.bf16.mxu0 0
    %1037 = vmatpush1.bf16.msra.mxu0 %v1029
    %1038 = vmatprep.subr.bf16.mxu0 0
    %1039 = vmatpush1.bf16.msra.mxu0 %v1030
    %1040 = vmatprep.subr.bf16.mxu0 0
    %1041 = vmatpush1.bf16.msra.mxu0 0
    %1042 = vmatprep.subr.bf16.mxu0 0
    %1043 = vmatpush1.bf16.msra.mxu0 0
    %1044 = vmatprep.subr.bf16.mxu0 0
    %1045 = vmatpush1.bf16.msra.mxu0 0
    %1046 = vmatprep.subr.bf16.mxu0 0
    %1047 = vmatpush1.bf16.msra.mxu0 0
    %1048 = vmatprep.subr.bf16.mxu0 0
    %1049 = vmatpush1.bf16.msra.mxu0 0
    %1050 = vmatprep.subr.bf16.mxu0 0
    %1051 = vmatpush1.bf16.msra.mxu0 0
    %1052 = vmatprep.subr.bf16.mxu0 0
    %1053 = vmatpush1.bf16.msra.mxu0 0
    %1054 = vmatprep.subr.bf16.mxu0 0
    %1055 = vmatpush1.bf16.msra.mxu0 0
    %1056 = vmatprep.subr.bf16.mxu0 0
    %1057 = vmatpush1.bf16.msra.mxu0 0
    %1058 = vmatprep.subr.bf16.mxu0 0
    %1059 = vmatpush1.bf16.msra.mxu0 0
    %1060 = vmatprep.subr.bf16.mxu0 0
    %1061 = vmatpush1.bf16.msra.mxu0 0
    %1062 = vmatprep.subr.bf16.mxu0 0
    %1063 = vmatpush1.bf16.msra.mxu0 0
    %1064 = vmatprep.subr.bf16.mxu0 0
    %1065 = vmatpush1.bf16.msra.mxu0 0
    %1066 = vmatprep.subr.bf16.mxu0 0
    %1067 = vmatpush1.bf16.msra.mxu0 0
    %1068 = vmatprep.mubr.bf16.mxu0 0
    %1069 = vmatmul.mubr.bf16.gmra.mrb[0].mxu0 %v1034
    %v1070 = vpop.f32.mrb[0].mxu0
    %v1071 = vadd.f32 %v1020, %v1070
    %v1072 = vpop.f32.mrb[0].mxu0
    %v1073 = vpop.f32.mrb[0].mxu0
    %v1074 = vpop.f32.mrb[0].mxu0
    %1075 = vdwg.mxu0
    %v1076 = vmax.f32 %v1071, 0.0
    %v1077 = vpack.c.bf16 %v1076, %v1076
    %s1078 = scalar_lea.vmem [#allocation7], 224
    %v1079 = vld [vmem:[%s1078] sm:$0xf]
    %v1080 = vld [vmem:[%s1078 + $0x4] sm:$0xf]
    %v1081 = vld [vmem:[%s1078 + $0x8] sm:$0xf]
    %v1082 = vld [vmem:[%s1078 + $0xc] sm:$0xf]
    %v1083 = vld [vmem:[#allocation8 + $0xf] sm:$0x1]
    %v1084 = vlaneseq
    %v1085 = vshrl.u32 %v1084, 7
    %v1086 = vsub.s32 0, %v1085
    %v1087 = vrot.slane %v1083, %v1086
    %v1092 = vunpack.c.l.b16 %v1079
    %v1093 = vunpack.c.l.b16 %v1080
    %v1094 = vunpack.c.l.b16 %v1081
    %v1095 = vunpack.c.l.b16 %v1082
    %v1096 = vpack.c.b16 %v1093, %v1092
    %v1097 = vpack.c.b16 %v1095, %v1094
    %v1101 = vsel %vm95, %v1077, 0
    %1103 = vmatprep.subr.bf16.mxu0 0
    %1104 = vmatpush1.bf16.msra.mxu0 %v1096
    %1105 = vmatprep.subr.bf16.mxu0 0
    %1106 = vmatpush1.bf16.msra.mxu0 %v1097
    %1107 = vmatprep.subr.bf16.mxu0 0
    %1108 = vmatpush1.bf16.msra.mxu0 0
    %1109 = vmatprep.subr.bf16.mxu0 0
    %1110 = vmatpush1.bf16.msra.mxu0 0
    %1111 = vmatprep.subr.bf16.mxu0 0
    %1112 = vmatpush1.bf16.msra.mxu0 0
    %1113 = vmatprep.subr.bf16.mxu0 0
    %1114 = vmatpush1.bf16.msra.mxu0 0
    %1115 = vmatprep.subr.bf16.mxu0 0
    %1116 = vmatpush1.bf16.msra.mxu0 0
    %1117 = vmatprep.subr.bf16.mxu0 0
    %1118 = vmatpush1.bf16.msra.mxu0 0
    %1119 = vmatprep.subr.bf16.mxu0 0
    %1120 = vmatpush1.bf16.msra.mxu0 0
    %1121 = vmatprep.subr.bf16.mxu0 0
    %1122 = vmatpush1.bf16.msra.mxu0 0
    %1123 = vmatprep.subr.bf16.mxu0 0
    %1124 = vmatpush1.bf16.msra.mxu0 0
    %1125 = vmatprep.subr.bf16.mxu0 0
    %1126 = vmatpush1.bf16.msra.mxu0 0
    %1127 = vmatprep.subr.bf16.mxu0 0
    %1128 = vmatpush1.bf16.msra.mxu0 0
    %1129 = vmatprep.subr.bf16.mxu0 0
    %1130 = vmatpush1.bf16.msra.mxu0 0
    %1131 = vmatprep.subr.bf16.mxu0 0
    %1132 = vmatpush1.bf16.msra.mxu0 0
    %1133 = vmatprep.subr.bf16.mxu0 0
    %1134 = vmatpush1.bf16.msra.mxu0 0
    %1135 = vmatprep.mubr.bf16.mxu0 0
    %1136 = vmatmul.mubr.bf16.gmra.mrb[0].mxu0 %v1101
    %v1137 = vpop.f32.mrb[0].mxu0
    %v1138 = vadd.f32 %v1087, %v1137
    %v1139 = vpop.f32.mrb[0].mxu0
    %v1140 = vpop.f32.mrb[0].mxu0
    %v1141 = vpop.f32.mrb[0].mxu0
    %1142 = vdwg.mxu0
    %v1143 = vmax.f32 %v1138, 0.0
    %v1144 = vpack.c.bf16 %v1143, %v1143
    %s1145 = scalar_lea.vmem [#allocation7], 240
    %v1146 = vld [vmem:[%s1145] sm:$0xf]
    %v1147 = vld [vmem:[%s1145 + $0x4] sm:$0xf]
    %v1148 = vld [vmem:[%s1145 + $0x8] sm:$0xf]
    %v1149 = vld [vmem:[%s1145 + $0xc] sm:$0xf]
    %v1150 = vld [vmem:[#allocation8 + $0x10] sm:$0x1]
    %v1151 = vlaneseq
    %v1152 = vshrl.u32 %v1151, 7
    %v1153 = vsub.s32 0, %v1152
    %v1154 = vrot.slane %v1150, %v1153
    %v1159 = vunpack.c.l.b16 %v1146
    %v1160 = vunpack.c.l.b16 %v1147
    %v1161 = vunpack.c.l.b16 %v1148
    %v1162 = vunpack.c.l.b16 %v1149
    %v1163 = vpack.c.b16 %v1160, %v1159
    %v1164 = vpack.c.b16 %v1162, %v1161
    %v1168 = vsel %vm95, %v1144, 0
    %1170 = vmatprep.subr.bf16.mxu0 0
    %1171 = vmatpush1.bf16.msra.mxu0 %v1163
    %1172 = vmatprep.subr.bf16.mxu0 0
    %1173 = vmatpush1.bf16.msra.mxu0 %v1164
    %1174 = vmatprep.subr.bf16.mxu0 0
    %1175 = vmatpush1.bf16.msra.mxu0 0
    %1176 = vmatprep.subr.bf16.mxu0 0
    %1177 = vmatpush1.bf16.msra.mxu0 0
    %1178 = vmatprep.subr.bf16.mxu0 0
    %1179 = vmatpush1.bf16.msra.mxu0 0
    %1180 = vmatprep.subr.bf16.mxu0 0
    %1181 = vmatpush1.bf16.msra.mxu0 0
    %1182 = vmatprep.subr.bf16.mxu0 0
    %1183 = vmatpush1.bf16.msra.mxu0 0
    %1184 = vmatprep.subr.bf16.mxu0 0
    %1185 = vmatpush1.bf16.msra.mxu0 0
    %1186 = vmatprep.subr.bf16.mxu0 0
    %1187 = vmatpush1.bf16.msra.mxu0 0
    %1188 = vmatprep.subr.bf16.mxu0 0
    %1189 = vmatpush1.bf16.msra.mxu0 0
    %1190 = vmatprep.subr.bf16.mxu0 0
    %1191 = vmatpush1.bf16.msra.mxu0 0
    %1192 = vmatprep.subr.bf16.mxu0 0
    %1193 = vmatpush1.bf16.msra.mxu0 0
    %1194 = vmatprep.subr.bf16.mxu0 0
    %1195 = vmatpush1.bf16.msra.mxu0 0
    %1196 = vmatprep.subr.bf16.mxu0 0
    %1197 = vmatpush1.bf16.msra.mxu0 0
    %1198 = vmatprep.subr.bf16.mxu0 0
    %1199 = vmatpush1.bf16.msra.mxu0 0
    %1200 = vmatprep.subr.bf16.mxu0 0
    %1201 = vmatpush1.bf16.msra.mxu0 0
    %1202 = vmatprep.mubr.bf16.mxu0 0
    %1203 = vmatmul.mubr.bf16.gmra.mrb[0].mxu0 %v1168
    %v1204 = vpop.f32.mrb[0].mxu0
    %v1205 = vadd.f32 %v1154, %v1204
    %v1206 = vpop.f32.mrb[0].mxu0
    %v1207 = vpop.f32.mrb[0].mxu0
    %v1208 = vpop.f32.mrb[0].mxu0
    %1209 = vdwg.mxu0
    %v1210 = vmax.f32 %v1205, 0.0
    %v1211 = vpack.c.bf16 %v1210, %v1210
    %s1212 = scalar_lea.vmem [#allocation7], 256
    %v1213 = vld [vmem:[%s1212] sm:$0xf]
    %v1214 = vld [vmem:[%s1212 + $0x4] sm:$0xf]
    %v1215 = vld [vmem:[%s1212 + $0x8] sm:$0xf]
    %v1216 = vld [vmem:[%s1212 + $0xc] sm:$0xf]
    %v1217 = vld [vmem:[#allocation8 + $0x11] sm:$0x1]
    %v1218 = vlaneseq
    %v1219 = vshrl.u32 %v1218, 7
    %v1220 = vsub.s32 0, %v1219
    %v1221 = vrot.slane %v1217, %v1220
    %v1226 = vunpack.c.l.b16 %v1213
    %v1227 = vunpack.c.l.b16 %v1214
    %v1228 = vunpack.c.l.b16 %v1215
    %v1229 = vunpack.c.l.b16 %v1216
    %v1230 = vpack.c.b16 %v1227, %v1226
    %v1231 = vpack.c.b16 %v1229, %v1228
    %v1235 = vsel %vm95, %v1211, 0
    %1237 = vmatprep.subr.bf16.mxu0 0
    %1238 = vmatpush1.bf16.msra.mxu0 %v1230
    %1239 = vmatprep.subr.bf16.mxu0 0
    %1240 = vmatpush1.bf16.msra.mxu0 %v1231
    %1241 = vmatprep.subr.bf16.mxu0 0
    %1242 = vmatpush1.bf16.msra.mxu0 0
    %1243 = vmatprep.subr.bf16.mxu0 0
    %1244 = vmatpush1.bf16.msra.mxu0 0
    %1245 = vmatprep.subr.bf16.mxu0 0
    %1246 = vmatpush1.bf16.msra.mxu0 0
    %1247 = vmatprep.subr.bf16.mxu0 0
    %1248 = vmatpush1.bf16.msra.mxu0 0
    %1249 = vmatprep.subr.bf16.mxu0 0
    %1250 = vmatpush1.bf16.msra.mxu0 0
    %1251 = vmatprep.subr.bf16.mxu0 0
    %1252 = vmatpush1.bf16.msra.mxu0 0
    %1253 = vmatprep.subr.bf16.mxu0 0
    %1254 = vmatpush1.bf16.msra.mxu0 0
    %1255 = vmatprep.subr.bf16.mxu0 0
    %1256 = vmatpush1.bf16.msra.mxu0 0
    %1257 = vmatprep.subr.bf16.mxu0 0
    %1258 = vmatpush1.bf16.msra.mxu0 0
    %1259 = vmatprep.subr.bf16.mxu0 0
    %1260 = vmatpush1.bf16.msra.mxu0 0
    %1261 = vmatprep.subr.bf16.mxu0 0
    %1262 = vmatpush1.bf16.msra.mxu0 0
    %1263 = vmatprep.subr.bf16.mxu0 0
    %1264 = vmatpush1.bf16.msra.mxu0 0
    %1265 = vmatprep.subr.bf16.mxu0 0
    %1266 = vmatpush1.bf16.msra.mxu0 0
    %1267 = vmatprep.subr.bf16.mxu0 0
    %1268 = vmatpush1.bf16.msra.mxu0 0
    %1269 = vmatprep.mubr.bf16.mxu0 0
    %1270 = vmatmul.mubr.bf16.gmra.mrb[0].mxu0 %v1235
    %v1271 = vpop.f32.mrb[0].mxu0
    %v1272 = vadd.f32 %v1221, %v1271
    %v1273 = vpop.f32.mrb[0].mxu0
    %v1274 = vpop.f32.mrb[0].mxu0
    %v1275 = vpop.f32.mrb[0].mxu0
    %1276 = vdwg.mxu0
    %v1277 = vmax.f32 %v1272, 0.0
    %v1278 = vpack.c.bf16 %v1277, %v1277
    %s1279 = scalar_lea.vmem [#allocation7], 272
    %v1280 = vld [vmem:[%s1279] sm:$0xf]
    %v1281 = vld [vmem:[%s1279 + $0x4] sm:$0xf]
    %v1282 = vld [vmem:[%s1279 + $0x8] sm:$0xf]
    %v1283 = vld [vmem:[%s1279 + $0xc] sm:$0xf]
    %v1284 = vld [vmem:[#allocation8 + $0x12] sm:$0x1]
    %v1285 = vlaneseq
    %v1286 = vshrl.u32 %v1285, 7
    %v1287 = vsub.s32 0, %v1286
    %v1288 = vrot.slane %v1284, %v1287
    %v1293 = vunpack.c.l.b16 %v1280
    %v1294 = vunpack.c.l.b16 %v1281
    %v1295 = vunpack.c.l.b16 %v1282
    %v1296 = vunpack.c.l.b16 %v1283
    %v1297 = vpack.c.b16 %v1294, %v1293
    %v1298 = vpack.c.b16 %v1296, %v1295
    %v1302 = vsel %vm95, %v1278, 0
    %1304 = vmatprep.subr.bf16.mxu0 0
    %1305 = vmatpush1.bf16.msra.mxu0 %v1297
    %1306 = vmatprep.subr.bf16.mxu0 0
    %1307 = vmatpush1.bf16.msra.mxu0 %v1298
    %1308 = vmatprep.subr.bf16.mxu0 0
    %1309 = vmatpush1.bf16.msra.mxu0 0
    %1310 = vmatprep.subr.bf16.mxu0 0
    %1311 = vmatpush1.bf16.msra.mxu0 0
    %1312 = vmatprep.subr.bf16.mxu0 0
    %1313 = vmatpush1.bf16.msra.mxu0 0
    %1314 = vmatprep.subr.bf16.mxu0 0
    %1315 = vmatpush1.bf16.msra.mxu0 0
    %1316 = vmatprep.subr.bf16.mxu0 0
    %1317 = vmatpush1.bf16.msra.mxu0 0
    %1318 = vmatprep.subr.bf16.mxu0 0
    %1319 = vmatpush1.bf16.msra.mxu0 0
    %1320 = vmatprep.subr.bf16.mxu0 0
    %1321 = vmatpush1.bf16.msra.mxu0 0
    %1322 = vmatprep.subr.bf16.mxu0 0
    %1323 = vmatpush1.bf16.msra.mxu0 0
    %1324 = vmatprep.subr.bf16.mxu0 0
    %1325 = vmatpush1.bf16.msra.mxu0 0
    %1326 = vmatprep.subr.bf16.mxu0 0
    %1327 = vmatpush1.bf16.msra.mxu0 0
    %1328 = vmatprep.subr.bf16.mxu0 0
    %1329 = vmatpush1.bf16.msra.mxu0 0
    %1330 = vmatprep.subr.bf16.mxu0 0
    %1331 = vmatpush1.bf16.msra.mxu0 0
    %1332 = vmatprep.subr.bf16.mxu0 0
    %1333 = vmatpush1.bf16.msra.mxu0 0
    %1334 = vmatprep.subr.bf16.mxu0 0
    %1335 = vmatpush1.bf16.msra.mxu0 0
    %1336 = vmatprep.mubr.bf16.mxu0 0
    %1337 = vmatmul.mubr.bf16.gmra.mrb[0].mxu0 %v1302
    %v1338 = vpop.f32.mrb[0].mxu0
    %v1339 = vadd.f32 %v1288, %v1338
    %v1340 = vpop.f32.mrb[0].mxu0
    %v1341 = vpop.f32.mrb[0].mxu0
    %v1342 = vpop.f32.mrb[0].mxu0
    %1343 = vdwg.mxu0
    %v1344 = vmax.f32 %v1339, 0.0
    %v1345 = vpack.c.bf16 %v1344, %v1344
    %s1346 = scalar_lea.vmem [#allocation7], 288
    %v1347 = vld [vmem:[%s1346] sm:$0xf]
    %v1348 = vld [vmem:[%s1346 + $0x4] sm:$0xf]
    %v1349 = vld [vmem:[%s1346 + $0x8] sm:$0xf]
    %v1350 = vld [vmem:[%s1346 + $0xc] sm:$0xf]
    %v1351 = vld [vmem:[#allocation8 + $0x13] sm:$0x1]
    %v1352 = vlaneseq
    %v1353 = vshrl.u32 %v1352, 7
    %v1354 = vsub.s32 0, %v1353
    %v1355 = vrot.slane %v1351, %v1354
    %v1360 = vunpack.c.l.b16 %v1347
    %v1361 = vunpack.c.l.b16 %v1348
    %v1362 = vunpack.c.l.b16 %v1349
    %v1363 = vunpack.c.l.b16 %v1350
    %v1364 = vpack.c.b16 %v1361, %v1360
    %v1365 = vpack.c.b16 %v1363, %v1362
    %v1369 = vsel %vm95, %v1345, 0
    %1371 = vmatprep.subr.bf16.mxu0 0
    %1372 = vmatpush1.bf16.msra.mxu0 %v1364
    %1373 = vmatprep.subr.bf16.mxu0 0
    %1374 = vmatpush1.bf16.msra.mxu0 %v1365
    %1375 = vmatprep.subr.bf16.mxu0 0
    %1376 = vmatpush1.bf16.msra.mxu0 0
    %1377 = vmatprep.subr.bf16.mxu0 0
    %1378 = vmatpush1.bf16.msra.mxu0 0
    %1379 = vmatprep.subr.bf16.mxu0 0
    %1380 = vmatpush1.bf16.msra.mxu0 0
    %1381 = vmatprep.subr.bf16.mxu0 0
    %1382 = vmatpush1.bf16.msra.mxu0 0
    %1383 = vmatprep.subr.bf16.mxu0 0
    %1384 = vmatpush1.bf16.msra.mxu0 0
    %1385 = vmatprep.subr.bf16.mxu0 0
    %1386 = vmatpush1.bf16.msra.mxu0 0
    %1387 = vmatprep.subr.bf16.mxu0 0
    %1388 = vmatpush1.bf16.msra.mxu0 0
    %1389 = vmatprep.subr.bf16.mxu0 0
    %1390 = vmatpush1.bf16.msra.mxu0 0
    %1391 = vmatprep.subr.bf16.mxu0 0
    %1392 = vmatpush1.bf16.msra.mxu0 0
    %1393 = vmatprep.subr.bf16.mxu0 0
    %1394 = vmatpush1.bf16.msra.mxu0 0
    %1395 = vmatprep.subr.bf16.mxu0 0
    %1396 = vmatpush1.bf16.msra.mxu0 0
    %1397 = vmatprep.subr.bf16.mxu0 0
    %1398 = vmatpush1.bf16.msra.mxu0 0
    %1399 = vmatprep.subr.bf16.mxu0 0
    %1400 = vmatpush1.bf16.msra.mxu0 0
    %1401 = vmatprep.subr.bf16.mxu0 0
    %1402 = vmatpush1.bf16.msra.mxu0 0
    %1403 = vmatprep.mubr.bf16.mxu0 0
    %1404 = vmatmul.mubr.bf16.gmra.mrb[0].mxu0 %v1369
    %v1405 = vpop.f32.mrb[0].mxu0
    %v1406 = vadd.f32 %v1355, %v1405
    %v1407 = vpop.f32.mrb[0].mxu0
    %v1408 = vpop.f32.mrb[0].mxu0
    %v1409 = vpop.f32.mrb[0].mxu0
    %1410 = vdwg.mxu0
    %v1411 = vmax.f32 %v1406, 0.0
    %v1412 = vpack.c.bf16 %v1411, %v1411
    %s1413 = scalar_lea.vmem [#allocation7], 304
    %v1414 = vld [vmem:[%s1413] sm:$0xf]
    %v1415 = vld [vmem:[%s1413 + $0x4] sm:$0xf]
    %v1416 = vld [vmem:[%s1413 + $0x8] sm:$0xf]
    %v1417 = vld [vmem:[%s1413 + $0xc] sm:$0xf]
    %v1418 = vld [vmem:[#allocation8 + $0x14] sm:$0x1]
    %v1419 = vlaneseq
    %v1420 = vshrl.u32 %v1419, 7
    %v1421 = vsub.s32 0, %v1420
    %v1422 = vrot.slane %v1418, %v1421
    %v1427 = vunpack.c.l.b16 %v1414
    %v1428 = vunpack.c.l.b16 %v1415
    %v1429 = vunpack.c.l.b16 %v1416
    %v1430 = vunpack.c.l.b16 %v1417
    %v1431 = vpack.c.b16 %v1428, %v1427
    %v1432 = vpack.c.b16 %v1430, %v1429
    %v1436 = vsel %vm95, %v1412, 0
    %1438 = vmatprep.subr.bf16.mxu0 0
    %1439 = vmatpush1.bf16.msra.mxu0 %v1431
    %1440 = vmatprep.subr.bf16.mxu0 0
    %1441 = vmatpush1.bf16.msra.mxu0 %v1432
    %1442 = vmatprep.subr.bf16.mxu0 0
    %1443 = vmatpush1.bf16.msra.mxu0 0
    %1444 = vmatprep.subr.bf16.mxu0 0
    %1445 = vmatpush1.bf16.msra.mxu0 0
    %1446 = vmatprep.subr.bf16.mxu0 0
    %1447 = vmatpush1.bf16.msra.mxu0 0
    %1448 = vmatprep.subr.bf16.mxu0 0
    %1449 = vmatpush1.bf16.msra.mxu0 0
    %1450 = vmatprep.subr.bf16.mxu0 0
    %1451 = vmatpush1.bf16.msra.mxu0 0
    %1452 = vmatprep.subr.bf16.mxu0 0
    %1453 = vmatpush1.bf16.msra.mxu0 0
    %1454 = vmatprep.subr.bf16.mxu0 0
    %1455 = vmatpush1.bf16.msra.mxu0 0
    %1456 = vmatprep.subr.bf16.mxu0 0
    %1457 = vmatpush1.bf16.msra.mxu0 0
    %1458 = vmatprep.subr.bf16.mxu0 0
    %1459 = vmatpush1.bf16.msra.mxu0 0
    %1460 = vmatprep.subr.bf16.mxu0 0
    %1461 = vmatpush1.bf16.msra.mxu0 0
    %1462 = vmatprep.subr.bf16.mxu0 0
    %1463 = vmatpush1.bf16.msra.mxu0 0
    %1464 = vmatprep.subr.bf16.mxu0 0
    %1465 = vmatpush1.bf16.msra.mxu0 0
    %1466 = vmatprep.subr.bf16.mxu0 0
    %1467 = vmatpush1.bf16.msra.mxu0 0
    %1468 = vmatprep.subr.bf16.mxu0 0
    %1469 = vmatpush1.bf16.msra.mxu0 0
    %1470 = vmatprep.mubr.bf16.mxu0 0
    %1471 = vmatmul.mubr.bf16.gmra.mrb[0].mxu0 %v1436
    %v1472 = vpop.f32.mrb[0].mxu0
    %v1473 = vadd.f32 %v1422, %v1472
    %v1474 = vpop.f32.mrb[0].mxu0
    %v1475 = vpop.f32.mrb[0].mxu0
    %v1476 = vpop.f32.mrb[0].mxu0
    %1477 = vdwg.mxu0
    %v1478 = vmax.f32 %v1473, 0.0
    %v1479 = vpack.c.bf16 %v1478, %v1478
    %s1480 = scalar_lea.vmem [#allocation7], 320
    %v1481 = vld [vmem:[%s1480] sm:$0xf]
    %v1482 = vld [vmem:[%s1480 + $0x4] sm:$0xf]
    %v1483 = vld [vmem:[%s1480 + $0x8] sm:$0xf]
    %v1484 = vld [vmem:[%s1480 + $0xc] sm:$0xf]
    %v1485 = vld [vmem:[#allocation8 + $0x15] sm:$0x1]
    %v1486 = vlaneseq
    %v1487 = vshrl.u32 %v1486, 7
    %v1488 = vsub.s32 0, %v1487
    %v1489 = vrot.slane %v1485, %v1488
    %v1494 = vunpack.c.l.b16 %v1481
    %v1495 = vunpack.c.l.b16 %v1482
    %v1496 = vunpack.c.l.b16 %v1483
    %v1497 = vunpack.c.l.b16 %v1484
    %v1498 = vpack.c.b16 %v1495, %v1494
    %v1499 = vpack.c.b16 %v1497, %v1496
    %v1503 = vsel %vm95, %v1479, 0
    %1505 = vmatprep.subr.bf16.mxu0 0
    %1506 = vmatpush1.bf16.msra.mxu0 %v1498
    %1507 = vmatprep.subr.bf16.mxu0 0
    %1508 = vmatpush1.bf16.msra.mxu0 %v1499
    %1509 = vmatprep.subr.bf16.mxu0 0
    %1510 = vmatpush1.bf16.msra.mxu0 0
    %1511 = vmatprep.subr.bf16.mxu0 0
    %1512 = vmatpush1.bf16.msra.mxu0 0
    %1513 = vmatprep.subr.bf16.mxu0 0
    %1514 = vmatpush1.bf16.msra.mxu0 0
    %1515 = vmatprep.subr.bf16.mxu0 0
    %1516 = vmatpush1.bf16.msra.mxu0 0
    %1517 = vmatprep.subr.bf16.mxu0 0
    %1518 = vmatpush1.bf16.msra.mxu0 0
    %1519 = vmatprep.subr.bf16.mxu0 0
    %1520 = vmatpush1.bf16.msra.mxu0 0
    %1521 = vmatprep.subr.bf16.mxu0 0
    %1522 = vmatpush1.bf16.msra.mxu0 0
    %1523 = vmatprep.subr.bf16.mxu0 0
    %1524 = vmatpush1.bf16.msra.mxu0 0
    %1525 = vmatprep.subr.bf16.mxu0 0
    %1526 = vmatpush1.bf16.msra.mxu0 0
    %1527 = vmatprep.subr.bf16.mxu0 0
    %1528 = vmatpush1.bf16.msra.mxu0 0
    %1529 = vmatprep.subr.bf16.mxu0 0
    %1530 = vmatpush1.bf16.msra.mxu0 0
    %1531 = vmatprep.subr.bf16.mxu0 0
    %1532 = vmatpush1.bf16.msra.mxu0 0
    %1533 = vmatprep.subr.bf16.mxu0 0
    %1534 = vmatpush1.bf16.msra.mxu0 0
    %1535 = vmatprep.subr.bf16.mxu0 0
    %1536 = vmatpush1.bf16.msra.mxu0 0
    %1537 = vmatprep.mubr.bf16.mxu0 0
    %1538 = vmatmul.mubr.bf16.gmra.mrb[0].mxu0 %v1503
    %v1539 = vpop.f32.mrb[0].mxu0
    %v1540 = vadd.f32 %v1489, %v1539
    %v1541 = vpop.f32.mrb[0].mxu0
    %v1542 = vpop.f32.mrb[0].mxu0
    %v1543 = vpop.f32.mrb[0].mxu0
    %1544 = vdwg.mxu0
    %v1545 = vmax.f32 %v1540, 0.0
    %v1546 = vpack.c.bf16 %v1545, %v1545
    %s1547 = scalar_lea.vmem [#allocation7], 336
    %v1548 = vld [vmem:[%s1547] sm:$0xf]
    %v1549 = vld [vmem:[%s1547 + $0x4] sm:$0xf]
    %v1550 = vld [vmem:[%s1547 + $0x8] sm:$0xf]
    %v1551 = vld [vmem:[%s1547 + $0xc] sm:$0xf]
    %v1552 = vld [vmem:[#allocation8 + $0x16] sm:$0x1]
    %v1553 = vlaneseq
    %v1554 = vshrl.u32 %v1553, 7
    %v1555 = vsub.s32 0, %v1554
    %v1556 = vrot.slane %v1552, %v1555
    %v1561 = vunpack.c.l.b16 %v1548
    %v1562 = vunpack.c.l.b16 %v1549
    %v1563 = vunpack.c.l.b16 %v1550
    %v1564 = vunpack.c.l.b16 %v1551
    %v1565 = vpack.c.b16 %v1562, %v1561
    %v1566 = vpack.c.b16 %v1564, %v1563
    %v1570 = vsel %vm95, %v1546, 0
    %1572 = vmatprep.subr.bf16.mxu0 0
    %1573 = vmatpush1.bf16.msra.mxu0 %v1565
    %1574 = vmatprep.subr.bf16.mxu0 0
    %1575 = vmatpush1.bf16.msra.mxu0 %v1566
    %1576 = vmatprep.subr.bf16.mxu0 0
    %1577 = vmatpush1.bf16.msra.mxu0 0
    %1578 = vmatprep.subr.bf16.mxu0 0
    %1579 = vmatpush1.bf16.msra.mxu0 0
    %1580 = vmatprep.subr.bf16.mxu0 0
    %1581 = vmatpush1.bf16.msra.mxu0 0
    %1582 = vmatprep.subr.bf16.mxu0 0
    %1583 = vmatpush1.bf16.msra.mxu0 0
    %1584 = vmatprep.subr.bf16.mxu0 0
    %1585 = vmatpush1.bf16.msra.mxu0 0
    %1586 = vmatprep.subr.bf16.mxu0 0
    %1587 = vmatpush1.bf16.msra.mxu0 0
    %1588 = vmatprep.subr.bf16.mxu0 0
    %1589 = vmatpush1.bf16.msra.mxu0 0
    %1590 = vmatprep.subr.bf16.mxu0 0
    %1591 = vmatpush1.bf16.msra.mxu0 0
    %1592 = vmatprep.subr.bf16.mxu0 0
    %1593 = vmatpush1.bf16.msra.mxu0 0
    %1594 = vmatprep.subr.bf16.mxu0 0
    %1595 = vmatpush1.bf16.msra.mxu0 0
    %1596 = vmatprep.subr.bf16.mxu0 0
    %1597 = vmatpush1.bf16.msra.mxu0 0
    %1598 = vmatprep.subr.bf16.mxu0 0
    %1599 = vmatpush1.bf16.msra.mxu0 0
    %1600 = vmatprep.subr.bf16.mxu0 0
    %1601 = vmatpush1.bf16.msra.mxu0 0
    %1602 = vmatprep.subr.bf16.mxu0 0
    %1603 = vmatpush1.bf16.msra.mxu0 0
    %1604 = vmatprep.mubr.bf16.mxu0 0
    %1605 = vmatmul.mubr.bf16.gmra.mrb[0].mxu0 %v1570
    %v1606 = vpop.f32.mrb[0].mxu0
    %v1607 = vadd.f32 %v1556, %v1606
    %v1608 = vpop.f32.mrb[0].mxu0
    %v1609 = vpop.f32.mrb[0].mxu0
    %v1610 = vpop.f32.mrb[0].mxu0
    %1611 = vdwg.mxu0
    %v1612 = vmax.f32 %v1607, 0.0
    %v1613 = vpack.c.bf16 %v1612, %v1612
    %s1614 = scalar_lea.vmem [#allocation7], 352
    %v1615 = vld [vmem:[%s1614] sm:$0xf]
    %v1616 = vld [vmem:[%s1614 + $0x4] sm:$0xf]
    %v1617 = vld [vmem:[%s1614 + $0x8] sm:$0xf]
    %v1618 = vld [vmem:[%s1614 + $0xc] sm:$0xf]
    %v1619 = vld [vmem:[#allocation8 + $0x17] sm:$0x1]
    %v1620 = vlaneseq
    %v1621 = vshrl.u32 %v1620, 7
    %v1622 = vsub.s32 0, %v1621
    %v1623 = vrot.slane %v1619, %v1622
    %v1628 = vunpack.c.l.b16 %v1615
    %v1629 = vunpack.c.l.b16 %v1616
    %v1630 = vunpack.c.l.b16 %v1617
    %v1631 = vunpack.c.l.b16 %v1618
    %v1632 = vpack.c.b16 %v1629, %v1628
    %v1633 = vpack.c.b16 %v1631, %v1630
    %v1637 = vsel %vm95, %v1613, 0
    %1639 = vmatprep.subr.bf16.mxu0 0
    %1640 = vmatpush1.bf16.msra.mxu0 %v1632
    %1641 = vmatprep.subr.bf16.mxu0 0
    %1642 = vmatpush1.bf16.msra.mxu0 %v1633
    %1643 = vmatprep.subr.bf16.mxu0 0
    %1644 = vmatpush1.bf16.msra.mxu0 0
    %1645 = vmatprep.subr.bf16.mxu0 0
    %1646 = vmatpush1.bf16.msra.mxu0 0
    %1647 = vmatprep.subr.bf16.mxu0 0
    %1648 = vmatpush1.bf16.msra.mxu0 0
    %1649 = vmatprep.subr.bf16.mxu0 0
    %1650 = vmatpush1.bf16.msra.mxu0 0
    %1651 = vmatprep.subr.bf16.mxu0 0
    %1652 = vmatpush1.bf16.msra.mxu0 0
    %1653 = vmatprep.subr.bf16.mxu0 0
    %1654 = vmatpush1.bf16.msra.mxu0 0
    %1655 = vmatprep.subr.bf16.mxu0 0
    %1656 = vmatpush1.bf16.msra.mxu0 0
    %1657 = vmatprep.subr.bf16.mxu0 0
    %1658 = vmatpush1.bf16.msra.mxu0 0
    %1659 = vmatprep.subr.bf16.mxu0 0
    %1660 = vmatpush1.bf16.msra.mxu0 0
    %1661 = vmatprep.subr.bf16.mxu0 0
    %1662 = vmatpush1.bf16.msra.mxu0 0
    %1663 = vmatprep.subr.bf16.mxu0 0
    %1664 = vmatpush1.bf16.msra.mxu0 0
    %1665 = vmatprep.subr.bf16.mxu0 0
    %1666 = vmatpush1.bf16.msra.mxu0 0
    %1667 = vmatprep.subr.bf16.mxu0 0
    %1668 = vmatpush1.bf16.msra.mxu0 0
    %1669 = vmatprep.subr.bf16.mxu0 0
    %1670 = vmatpush1.bf16.msra.mxu0 0
    %1671 = vmatprep.mubr.bf16.mxu0 0
    %1672 = vmatmul.mubr.bf16.gmra.mrb[0].mxu0 %v1637
    %v1673 = vpop.f32.mrb[0].mxu0
    %v1674 = vadd.f32 %v1623, %v1673
    %v1675 = vpop.f32.mrb[0].mxu0
    %v1676 = vpop.f32.mrb[0].mxu0
    %v1677 = vpop.f32.mrb[0].mxu0
    %1678 = vdwg.mxu0
    %v1679 = vmax.f32 %v1674, 0.0
    %v1680 = vpack.c.bf16 %v1679, %v1679
    %s1681 = scalar_lea.vmem [#allocation7], 368
    %v1682 = vld [vmem:[%s1681] sm:$0xf]
    %v1683 = vld [vmem:[%s1681 + $0x4] sm:$0xf]
    %v1684 = vld [vmem:[%s1681 + $0x8] sm:$0xf]
    %v1685 = vld [vmem:[%s1681 + $0xc] sm:$0xf]
    %v1686 = vld [vmem:[#allocation8 + $0x18] sm:$0x1]
    %v1687 = vlaneseq
    %v1688 = vshrl.u32 %v1687, 7
    %v1689 = vsub.s32 0, %v1688
    %v1690 = vrot.slane %v1686, %v1689
    %v1695 = vunpack.c.l.b16 %v1682
    %v1696 = vunpack.c.l.b16 %v1683
    %v1697 = vunpack.c.l.b16 %v1684
    %v1698 = vunpack.c.l.b16 %v1685
    %v1699 = vpack.c.b16 %v1696, %v1695
    %v1700 = vpack.c.b16 %v1698, %v1697
    %v1704 = vsel %vm95, %v1680, 0
    %1706 = vmatprep.subr.bf16.mxu0 0
    %1707 = vmatpush1.bf16.msra.mxu0 %v1699
    %1708 = vmatprep.subr.bf16.mxu0 0
    %1709 = vmatpush1.bf16.msra.mxu0 %v1700
    %1710 = vmatprep.subr.bf16.mxu0 0
    %1711 = vmatpush1.bf16.msra.mxu0 0
    %1712 = vmatprep.subr.bf16.mxu0 0
    %1713 = vmatpush1.bf16.msra.mxu0 0
    %1714 = vmatprep.subr.bf16.mxu0 0
    %1715 = vmatpush1.bf16.msra.mxu0 0
    %1716 = vmatprep.subr.bf16.mxu0 0
    %1717 = vmatpush1.bf16.msra.mxu0 0
    %1718 = vmatprep.subr.bf16.mxu0 0
    %1719 = vmatpush1.bf16.msra.mxu0 0
    %1720 = vmatprep.subr.bf16.mxu0 0
    %1721 = vmatpush1.bf16.msra.mxu0 0
    %1722 = vmatprep.subr.bf16.mxu0 0
    %1723 = vmatpush1.bf16.msra.mxu0 0
    %1724 = vmatprep.subr.bf16.mxu0 0
    %1725 = vmatpush1.bf16.msra.mxu0 0
    %1726 = vmatprep.subr.bf16.mxu0 0
    %1727 = vmatpush1.bf16.msra.mxu0 0
    %1728 = vmatprep.subr.bf16.mxu0 0
    %1729 = vmatpush1.bf16.msra.mxu0 0
    %1730 = vmatprep.subr.bf16.mxu0 0
    %1731 = vmatpush1.bf16.msra.mxu0 0
    %1732 = vmatprep.subr.bf16.mxu0 0
    %1733 = vmatpush1.bf16.msra.mxu0 0
    %1734 = vmatprep.subr.bf16.mxu0 0
    %1735 = vmatpush1.bf16.msra.mxu0 0
    %1736 = vmatprep.subr.bf16.mxu0 0
    %1737 = vmatpush1.bf16.msra.mxu0 0
    %1738 = vmatprep.mubr.bf16.mxu0 0
    %1739 = vmatmul.mubr.bf16.gmra.mrb[0].mxu0 %v1704
    %v1740 = vpop.f32.mrb[0].mxu0
    %v1741 = vadd.f32 %v1690, %v1740
    %v1742 = vpop.f32.mrb[0].mxu0
    %v1743 = vpop.f32.mrb[0].mxu0
    %v1744 = vpop.f32.mrb[0].mxu0
    %1745 = vdwg.mxu0
    %1746 = vst [vmem:[#allocation10] sm:$0xff] %v1741
    // Predicated region
    $region34: #{tpu_custom_call.1} parent=1 // pred_check
      _
    $region35: #{tpu_custom_call.1} parent=1 // pred_check_branch
      %1748 = sbr.rel (0) target = $region37
    $region36: #{tpu_custom_call.1} parent=1 // pred_region
      %s1750 = ssub.s32 128, 128
      %1751 = vsyncadd [#allocation4], %s1750
      %s1753 = sshll.u32 [#allocation10], 4
      %s1754 = int_to_ptr.vmem [resolvable:$true] %s1753
      %1756 = dma.vmem_to_hbm [thread:$0]  %s1754, 128, %s4, [#allocation4]
    $region37: #{tpu_custom_call.1} parent=1 // pred_fallthru
      _
    // Predicated region
    $region38: #{tpu_custom_call.1} parent=1 // pred_check
      _
    $region39: #{tpu_custom_call.1} parent=1 // pred_check_branch
      %1758 = sbr.rel (0) target = $region41
    $region40: #{tpu_custom_call.1} parent=1 // pred_region
      %1759 = dma.done [#allocation4], 128
    $region41: #{tpu_custom_call.1} parent=1 // pred_fallthru
      _
    %1760 = vsyncpa [#allocation3], 1
    %1761 = vsyncpa [#allocation6], 1
    %1762 = vsyncpa [#allocation9], 1
    %1763 = vsyncpa [#allocation4], 1

</llo_original>
